<compile_context>
chip_gen: v5e
topology: v5e:2x2
jax: 0.10.0
libtpu: 0.0.40
codegen_flags: <defaults>
</compile_context>

<pallas_src>
import functools

import numpy as np
import jax
import jax.numpy as jnp
from jax import lax
from jax.experimental import pallas as pl
from jax.experimental.pallas import tpu as pltpu


def _round_up(x, m):
    return (x + m - 1) // m * m


def _dot(a, b):
    # bf16 x bf16 -> f32 accumulation on the MXU (native rate, no multi-pass f32).
    return jnp.dot(a, b, preferred_element_type=jnp.float32)


def freq_attn_kernel(x_ref, wqkv_ref, bqkv_ref, wo_ref, bo_ref,
                     cs_ref, icos_ref, nisin_ref, wgt_ref, o_ref,
                     *, fp, emb, seq, batch_tile):
    bf16 = jnp.bfloat16

    # Grid-invariant operands: loaded once per grid step, hoisted out of the batch loop.
    wqkv = wqkv_ref[...]        # [E, 3E]   bf16  packed [wq | wk | wv]
    wo = wo_ref[...]            # [E, E]    bf16
    bo = bo_ref[...]            # [1, E]    f32
    cs = cs_ref[...]            # [2Fp, S]  bf16  stacked [cos; -sin] forward DFT
    icos = icos_ref[...]        # [S, Fp]   bf16  (w_f/S) * cos   inverse DFT
    nisin = nisin_ref[...]      # [S, Fp]   bf16  -(w_f/S) * sin  inverse DFT

    # Hoisted loop-invariant broadcasts (JAX does not CSE broadcast_in_dim).
    wgt_full = jnp.broadcast_to(wgt_ref[...], (fp, emb))           # [Fp, E] f32
    # Bias re-injection for the commuted projection: DFT of a seq-constant bias is S*b on the
    # DC real row (row 0) and exactly zero on every other row (bqkv is pre-scaled by S on host).
    is_dc_row = lax.broadcasted_iota(jnp.int32, (2 * fp, 1), 0) == 0
    dc_bias = jnp.where(is_dc_row, bqkv_ref[...], 0.0)             # [2Fp, 3E] f32

    def body(b, carry):
        xb = x_ref[b]                                              # [S, E] bf16
        # Forward DFT of x once (commuted with the projections): [2Fp,S] x [S,E].
        sx = _dot(cs, xb)                                          # [2Fp, E] f32
        # Fused Q|K|V projection in the frequency domain + exact DC-row bias.
        qkvf = _dot(sx.astype(bf16), wqkv) + dc_bias               # [2Fp, 3E] f32
        qr, kr, vr = qkvf[:fp, :emb], qkvf[:fp, emb:2 * emb], qkvf[:fp, 2 * emb:]
        qi, ki, vi = qkvf[fp:, :emb], qkvf[fp:, emb:2 * emb], qkvf[fp:, 2 * emb:]

        # |q_fft * conj(k_fft)| = |q_fft| * |k_fft|   (padded rows are exact zeros).
        # TODO(synk): at production S/E consider keeping cs and the q/k path in f32 — bf16
        # rounding of these unnormalized exponents grows with S*E (see review concern).
        aw = jnp.sqrt((qr * qr + qi * qi) * (kr * kr + ki * ki))   # [Fp, E]

        # softmax over the full S frequencies folded onto the half spectrum via the
        # conjugate-pair multiplicity weights (DC/Nyquist 1, interior 2, pad 0).
        m = jnp.max(aw, axis=0, keepdims=True)
        e = jnp.exp(aw - m)
        denom = jnp.sum(e * wgt_full, axis=0, keepdims=True)
        p = e * pl.reciprocal(denom, approx=True)                  # [Fp, E]

        # Re(ifft(p * v_fft)) via two stacked inverse matmuls (no sublane concatenate).
        attn = (_dot(icos, (p * vr).astype(bf16)) +
                _dot(nisin, (p * vi).astype(bf16)))                # [S, E] f32

        out = _dot(attn.astype(bf16), wo) + bo                     # [S, E] f32
        o_ref[b] = out.astype(o_ref.dtype)
        return carry

    lax.fori_loop(0, batch_tile, body, 0, unroll=True)


def _dft_operands(S, Fp):
    """Forward DFT [2Fp, S]; split weighted inverse DFT [S, Fp] x2; multiplicity [Fp, 1]."""
    F = S // 2 + 1
    f = np.arange(Fp).astype(np.float64)
    valid = (np.arange(Fp) < F).astype(np.float64)[:, None]        # zero out padded rows
    ang = 2.0 * np.pi * np.outer(f, np.arange(S)) / S               # [Fp, S]
    cs = np.concatenate([np.cos(ang) * valid, -np.sin(ang) * valid], axis=0)   # Re/Im of e^{-i ang}

    # Conjugate-pair multiplicity: DC (and Nyquist for even S) appear once, interior twice.
    w = np.where(np.arange(Fp) < F, 2.0, 0.0)
    w[0] = 1.0
    if S % 2 == 0:
        w[S // 2] = 1.0

    iang = 2.0 * np.pi * np.outer(np.arange(S), f) / S              # [S, Fp]
    icos = (w / S) * np.cos(iang)
    nisin = -(w / S) * np.sin(iang)

    return (jnp.asarray(cs, jnp.bfloat16),
            jnp.asarray(icos, jnp.bfloat16),
            jnp.asarray(nisin, jnp.bfloat16),
            jnp.asarray(w.reshape(Fp, 1), jnp.float32))


def frequency_domain_attention(x, params, num_heads, *, batch_tile=None,
                               out_dtype=jnp.float32):
    B, S, E = x.shape
    assert E % num_heads == 0
    # Head split is a pure reshape for this module; no special handling needed in-kernel.

    F = S // 2 + 1
    Fp = _round_up(F, 8)     # sublane alignment only; padded rows/cols are exact zeros

    cs, icos, nisin, wgt = _dft_operands(S, Fp)

    if batch_tile is None:
        # Pack several tiny batch elements per step (~0.35us/step overhead), but keep the grid
        # length >= 2 (and even when possible) so both v7x TensorCores get work.
        cands = (8, 4, 2, 1) if S * E <= 128 * 128 else (1,)

        def ok(d):
            if B % d:
                return False
            g = B // d
            if B >= 2 and g < 2:
                return False
            if B >= 4 and g % 2:
                return False
            return True

        batch_tile = next((d for d in cands if ok(d)), 1)
    assert B % batch_tile == 0

    bf16 = jnp.bfloat16
    xb = x.astype(bf16)
    wqkv = jnp.concatenate([params["wq"], params["wk"], params["wv"]], axis=1).astype(bf16)
    # DC-row bias for the commuted projection: DFT of a constant-over-seq bias is S*b at f=0.
    bqkv = (float(S) * jnp.concatenate([params["bq"], params["bk"], params["bv"]])
            ).reshape(1, 3 * E).astype(jnp.float32)
    wo = params["wo"].astype(bf16)
    bo = params["bo"].reshape(1, E).astype(jnp.float32)

    kernel = functools.partial(freq_attn_kernel, fp=Fp, emb=E, seq=S, batch_tile=batch_tile)

    # VMEM budget computed from actual buffer sizes (single-buffered invariants,
    # double-buffered x/out blocks, plus a generous allowance for f32 temporaries).
    out_itemsize = int(jnp.dtype(out_dtype).itemsize)
    inv_bytes = ((E * 3 * E + E * E + 2 * Fp * S + 2 * S * Fp) * 2      # bf16 weights + DFT mats
                 + (3 * E + E + Fp) * 4)                                # f32 biases + multiplicity
    io_bytes = (2 * batch_tile * S * E * 2                              # x block (bf16, 2 bufs)
                + 2 * batch_tile * S * E * out_itemsize)                # out block (2 bufs)
    tmp_bytes = (2 * Fp * 3 * E + 2 * Fp * E + 10 * Fp * E + 3 * S * E) * 4
    vmem_limit = int(min(max((inv_bytes + io_bytes + tmp_bytes) * 3 // 2 + (4 << 20),
                             32 << 20), 100 << 20))

    operands = (xb, wqkv, bqkv, wo, bo, cs, icos, nisin, wgt)

    # TODO(synk): for very large S (e.g. >~2-3k on v7x's 64 MiB VMEM) additionally tile the
    # frequency axis as an "arbitrary" reduction grid axis (streaming softmax + inverse-DFT
    # accumulation) so only an F-chunk of the DFT matrices is resident; unnecessary here.
    def build(single_buffer_invariants):
        extra = ({"pipeline_mode": pl.Buffered(buffer_count=1)}
                 if single_buffer_invariants else {})

        def inv(shape):   # grid-invariant operand: fixed block, single buffer requested
            return pl.BlockSpec(shape, lambda i: (0,) * len(shape), **extra)

        in_specs = [
            pl.BlockSpec((batch_tile, S, E), lambda i: (i, 0, 0)),   # x (pipelined)
            inv((E, 3 * E)), inv((1, 3 * E)),                        # wqkv, S*bqkv (DC row)
            inv((E, E)), inv((1, E)),                                # wo, bo
            inv((2 * Fp, S)),                                        # stacked forward DFT
            inv((S, Fp)), inv((S, Fp)),                              # icos, -isin inverse DFT
            inv((Fp, 1)),                                            # multiplicity weights
        ]
        return pl.pallas_call(
            kernel,
            out_shape=jax.ShapeDtypeStruct((B, S, E), out_dtype),
            grid_spec=pltpu.PrefetchScalarGridSpec(
                num_scalar_prefetch=0,
                grid=(B // batch_tile,),
                in_specs=in_specs,
                out_specs=pl.BlockSpec((batch_tile, S, E), lambda i: (i, 0, 0)),
            ),
            compiler_params=pltpu.CompilerParams(
                dimension_semantics=("parallel",),
                vmem_limit_bytes=vmem_limit,
            ),
        )

    try:
        out = build(True)(*operands)
        jax.block_until_ready(out)
        return out
    except Exception:
        # Fallback if this JAX build rejects pipeline_mode=pl.Buffered(1) on pallas_call
        # BlockSpecs: identical kernel with default double-buffered invariant operands.
        return build(False)(*operands)


# --------------------------------------------------------------------------
# Pure-JAX reference mirroring the PyTorch forward (eval mode, mask unused).
# --------------------------------------------------------------------------
def reference(x, params, num_heads):
    B, S, E = x.shape
    Dh = E // num_heads
    hp = jax.lax.Precision.HIGHEST

    def lin(t, w, b):
        return jnp.dot(t, w, precision=hp) + b

    q = lin(x, params["wq"], params["bq"])
    k = lin(x, params["wk"], params["bk"])
    v = lin(x, params["wv"], params["bv"])

    def split(t):
        return t.reshape(B, S, num_heads, Dh).transpose(0, 2, 1, 3)  # [B, H, S, Dh]

    q, k, v = split(q), split(k), split(v)
    qf = jnp.fft.fft(q, axis=2)
    kf = jnp.fft.fft(k, axis=2)
    vf = jnp.fft.fft(v, axis=2)
    attn = jnp.abs(qf * jnp.conj(kf))
    attn = jax.nn.softmax(attn, axis=2)
    outf = attn * vf
    out = jnp.real(jnp.fft.ifft(outf, axis=2))
    out = out.transpose(0, 2, 1, 3).reshape(B, S, E)
    return lin(out, params["wo"], params["bo"])   # dropout: inference no-op


if __name__ == "__main__":
    B, S, E, H = 2, 8, 32, 4
    key = jax.random.PRNGKey(0)
    ks = jax.random.split(key, 9)

    # ~PyTorch nn.Linear default init scale.
    scale = 0.5 / np.sqrt(E)
    params = {
        "wq": scale * jax.random.normal(ks[1], (E, E), jnp.float32),
        "bq": 0.01 * jax.random.normal(ks[2], (E,), jnp.float32),
        "wk": scale * jax.random.normal(ks[3], (E, E), jnp.float32),
        "bk": 0.01 * jax.random.normal(ks[4], (E,), jnp.float32),
        "wv": scale * jax.random.normal(ks[5], (E, E), jnp.float32),
        "bv": 0.01 * jax.random.normal(ks[6], (E,), jnp.float32),
        "wo": scale * jax.random.normal(ks[7], (E, E), jnp.float32),
        "bo": 0.01 * jax.random.normal(ks[8], (E,), jnp.float32),
    }
    x = jax.random.normal(ks[0], (B, S, E), jnp.float32)

    out = jax.block_until_ready(frequency_domain_attention(x, params, H))
    ref = reference(x, params, H)

    # bf16 MXU operands vs an f32 FFT reference: the softmax on the unnormalized
    # |q_fft * conj(k_fft)| exponents amplifies input rounding, so check agreement
    # to within a few percent of the output scale.
    max_err = float(jnp.max(jnp.abs(out - ref)))
    tol = 0.05 * float(jnp.max(jnp.abs(ref))) + 0.01
    if not np.isfinite(max_err) or max_err > tol:
        raise AssertionError(f"mismatch vs reference: max abs err {max_err} > tol {tol}")

    print("KERNEL_OK")
</pallas_src>

<mosaic_0001>
module attributes {stable_mosaic.version = 11 : i64} {
  func.func @freq_attn_kernel(%arg0: i32, %arg1: memref<1x8x32xbf16, #tpu.memory_space<vmem>>, %arg2: memref<32x96xbf16, #tpu.memory_space<vmem>>, %arg3: memref<1x96xf32, #tpu.memory_space<vmem>>, %arg4: memref<32x32xbf16, #tpu.memory_space<vmem>>, %arg5: memref<1x32xf32, #tpu.memory_space<vmem>>, %arg6: memref<16x8xbf16, #tpu.memory_space<vmem>>, %arg7: memref<8x8xbf16, #tpu.memory_space<vmem>>, %arg8: memref<8x8xbf16, #tpu.memory_space<vmem>>, %arg9: memref<8x1xf32, #tpu.memory_space<vmem>>, %arg10: memref<1x8x32xf32, #tpu.memory_space<vmem>>) attributes {dimension_semantics = [#tpu.dimension_semantics<parallel>], iteration_bounds = array<i64: 2>, scalar_prefetch = 0 : i64, scratch_operands = 0 : i64, tpu.core_type = #tpu.core_type<tc>, window_params = [{transform_indices = @transform_0, window_bounds = array<i64: 1, 8, 32>}, {pipeline_mode = #tpu.pipeline_mode<synchronous>, transform_indices = @transform_1, window_bounds = array<i64: 32, 96>}, {pipeline_mode = #tpu.pipeline_mode<synchronous>, transform_indices = @transform_2, window_bounds = array<i64: 1, 96>}, {pipeline_mode = #tpu.pipeline_mode<synchronous>, transform_indices = @transform_3, window_bounds = array<i64: 32, 32>}, {pipeline_mode = #tpu.pipeline_mode<synchronous>, transform_indices = @transform_4, window_bounds = array<i64: 1, 32>}, {pipeline_mode = #tpu.pipeline_mode<synchronous>, transform_indices = @transform_5, window_bounds = array<i64: 16, 8>}, {pipeline_mode = #tpu.pipeline_mode<synchronous>, transform_indices = @transform_6, window_bounds = array<i64: 8, 8>}, {pipeline_mode = #tpu.pipeline_mode<synchronous>, transform_indices = @transform_7, window_bounds = array<i64: 8, 8>}, {pipeline_mode = #tpu.pipeline_mode<synchronous>, transform_indices = @transform_8, window_bounds = array<i64: 8, 1>}, {transform_indices = @transform_9, window_bounds = array<i64: 1, 8, 32>}]} {
    %c0 = arith.constant 0 : index
    %c0_0 = arith.constant 0 : index
    %0 = vector.load %arg2[%c0, %c0_0] : memref<32x96xbf16, #tpu.memory_space<vmem>>, vector<32x96xbf16>
    %c0_1 = arith.constant 0 : index
    %c0_2 = arith.constant 0 : index
    %1 = vector.load %arg4[%c0_1, %c0_2] : memref<32x32xbf16, #tpu.memory_space<vmem>>, vector<32x32xbf16>
    %c0_3 = arith.constant 0 : index
    %c0_4 = arith.constant 0 : index
    %2 = vector.load %arg5[%c0_3, %c0_4] : memref<1x32xf32, #tpu.memory_space<vmem>>, vector<1x32xf32>
    %c0_5 = arith.constant 0 : index
    %c0_6 = arith.constant 0 : index
    %3 = vector.load %arg6[%c0_5, %c0_6] : memref<16x8xbf16, #tpu.memory_space<vmem>>, vector<16x8xbf16>
    %c0_7 = arith.constant 0 : index
    %c0_8 = arith.constant 0 : index
    %4 = vector.load %arg7[%c0_7, %c0_8] : memref<8x8xbf16, #tpu.memory_space<vmem>>, vector<8x8xbf16>
    %c0_9 = arith.constant 0 : index
    %c0_10 = arith.constant 0 : index
    %5 = vector.load %arg8[%c0_9, %c0_10] : memref<8x8xbf16, #tpu.memory_space<vmem>>, vector<8x8xbf16>
    %c0_11 = arith.constant 0 : index
    %c0_12 = arith.constant 0 : index
    %6 = vector.load %arg9[%c0_11, %c0_12] : memref<8x1xf32, #tpu.memory_space<vmem>>, vector<8x1xf32>
    %7 = vector.shape_cast %6 : vector<8x1xf32> to vector<8x1xf32>
    %8 = vector.broadcast %7 : vector<8x1xf32> to vector<8x32xf32>
    %9 = tpu.iota {dimensions = array<i32: 0>} : vector<16x1xi32>
    %c0_i32 = arith.constant 0 : i32
    %10 = vector.broadcast %c0_i32 : i32 to vector<16x1xi32>
    %11 = arith.cmpi eq, %9, %10 : vector<16x1xi32>
    %c0_13 = arith.constant 0 : index
    %c0_14 = arith.constant 0 : index
    %12 = vector.load %arg3[%c0_13, %c0_14] : memref<1x96xf32, #tpu.memory_space<vmem>>, vector<1x96xf32>
    %cst = arith.constant 0.000000e+00 : f32
    %13 = vector.shape_cast %11 : vector<16x1xi1> to vector<16x1xi1>
    %14 = vector.broadcast %13 : vector<16x1xi1> to vector<16x96xi1>
    %15 = vector.shape_cast %12 : vector<1x96xf32> to vector<1x96xf32>
    %16 = vector.broadcast %15 : vector<1x96xf32> to vector<16x96xf32>
    %17 = vector.broadcast %cst : f32 to vector<16x96xf32>
    %18 = arith.select %14, %16, %17 : vector<16x96xi1>, vector<16x96xf32>
    %c0_i32_15 = arith.constant 0 : i32
    %19 = arith.index_cast %c0_i32_15 : i32 to index
    %c0_16 = arith.constant 0 : index
    %c0_17 = arith.constant 0 : index
    %20 = vector.load %arg1[%19, %c0_16, %c0_17] : memref<1x8x32xbf16, #tpu.memory_space<vmem>>, vector<1x8x32xbf16>
    %21 = vector.shape_cast %20 : vector<1x8x32xbf16> to vector<8x32xbf16>
    %cst_18 = arith.constant dense<0.000000e+00> : vector<16x32xf32>
    %22 = tpu.matmul %3, %21, %cst_18 {dimension_numbers = #tpu.dot_dimension_numbers<[1], [0], [0], [1], [0, 0, 1, 1], [], []>} : vector<16x8xbf16>, vector<8x32xbf16>, vector<16x32xf32> -> vector<16x32xf32>
    %23 = arith.truncf %22 : vector<16x32xf32> to vector<16x32xbf16>
    %cst_19 = arith.constant dense<0.000000e+00> : vector<16x96xf32>
    %24 = tpu.matmul %23, %0, %cst_19 {dimension_numbers = #tpu.dot_dimension_numbers<[1], [0], [0], [1], [0, 0, 1, 1], [], []>} : vector<16x32xbf16>, vector<32x96xbf16>, vector<16x96xf32> -> vector<16x96xf32>
    %25 = arith.addf %24, %18 : vector<16x96xf32>
    %26 = vector.extract_strided_slice %25 {offsets = [0, 0], sizes = [8, 32], strides = [1, 1]} : vector<16x96xf32> to vector<8x32xf32>
    %27 = vector.extract_strided_slice %25 {offsets = [0, 32], sizes = [8, 32], strides = [1, 1]} : vector<16x96xf32> to vector<8x32xf32>
    %28 = vector.extract_strided_slice %25 {offsets = [0, 64], sizes = [8, 32], strides = [1, 1]} : vector<16x96xf32> to vector<8x32xf32>
    %29 = vector.extract_strided_slice %25 {offsets = [8, 0], sizes = [8, 32], strides = [1, 1]} : vector<16x96xf32> to vector<8x32xf32>
    %30 = vector.extract_strided_slice %25 {offsets = [8, 32], sizes = [8, 32], strides = [1, 1]} : vector<16x96xf32> to vector<8x32xf32>
    %31 = vector.extract_strided_slice %25 {offsets = [8, 64], sizes = [8, 32], strides = [1, 1]} : vector<16x96xf32> to vector<8x32xf32>
    %32 = arith.mulf %26, %26 : vector<8x32xf32>
    %33 = arith.mulf %29, %29 : vector<8x32xf32>
    %34 = arith.addf %32, %33 : vector<8x32xf32>
    %35 = arith.mulf %27, %27 : vector<8x32xf32>
    %36 = arith.mulf %30, %30 : vector<8x32xf32>
    %37 = arith.addf %35, %36 : vector<8x32xf32>
    %38 = arith.mulf %34, %37 : vector<8x32xf32>
    %39 = math.sqrt %38 : vector<8x32xf32>
    %cst_20 = arith.constant dense<0xFF800000> : vector<32xf32>
    %40 = vector.multi_reduction <maximumf>, %39, %cst_20 [0] : vector<8x32xf32> to vector<32xf32>
    %41 = vector.shape_cast %40 : vector<32xf32> to vector<1x32xf32>
    %42 = vector.broadcast %41 : vector<1x32xf32> to vector<8x32xf32>
    %43 = arith.subf %39, %42 : vector<8x32xf32>
    %44 = math.exp %43 : vector<8x32xf32>
    %45 = arith.mulf %44, %8 : vector<8x32xf32>
    %cst_21 = arith.constant dense<0.000000e+00> : vector<32xf32>
    %46 = vector.multi_reduction <add>, %45, %cst_21 [0] : vector<8x32xf32> to vector<32xf32>
    %47 = vector.shape_cast %46 : vector<32xf32> to vector<1x32xf32>
    %48 = tpu.reciprocal %47 {approx = true} : vector<1x32xf32> -> vector<1x32xf32>
    %49 = vector.broadcast %48 : vector<1x32xf32> to vector<8x32xf32>
    %50 = arith.mulf %44, %49 : vector<8x32xf32>
    %51 = arith.mulf %50, %28 : vector<8x32xf32>
    %52 = arith.truncf %51 : vector<8x32xf32> to vector<8x32xbf16>
    %cst_22 = arith.constant dense<0.000000e+00> : vector<8x32xf32>
    %53 = tpu.matmul %4, %52, %cst_22 {dimension_numbers = #tpu.dot_dimension_numbers<[1], [0], [0], [1], [0, 0, 1, 1], [], []>} : vector<8x8xbf16>, vector<8x32xbf16>, vector<8x32xf32> -> vector<8x32xf32>
    %54 = arith.mulf %50, %31 : vector<8x32xf32>
    %55 = arith.truncf %54 : vector<8x32xf32> to vector<8x32xbf16>
    %cst_23 = arith.constant dense<0.000000e+00> : vector<8x32xf32>
    %56 = tpu.matmul %5, %55, %cst_23 {dimension_numbers = #tpu.dot_dimension_numbers<[1], [0], [0], [1], [0, 0, 1, 1], [], []>} : vector<8x8xbf16>, vector<8x32xbf16>, vector<8x32xf32> -> vector<8x32xf32>
    %57 = arith.addf %53, %56 : vector<8x32xf32>
    %58 = arith.truncf %57 : vector<8x32xf32> to vector<8x32xbf16>
    %cst_24 = arith.constant dense<0.000000e+00> : vector<8x32xf32>
    %59 = tpu.matmul %58, %1, %cst_24 {dimension_numbers = #tpu.dot_dimension_numbers<[1], [0], [0], [1], [0, 0, 1, 1], [], []>} : vector<8x32xbf16>, vector<32x32xbf16>, vector<8x32xf32> -> vector<8x32xf32>
    %60 = vector.broadcast %2 : vector<1x32xf32> to vector<8x32xf32>
    %61 = arith.addf %59, %60 : vector<8x32xf32>
    %62 = arith.index_cast %c0_i32_15 : i32 to index
    %c0_25 = arith.constant 0 : index
    %c0_26 = arith.constant 0 : index
    %63 = vector.load %arg10[%62, %c0_25, %c0_26] : memref<1x8x32xf32, #tpu.memory_space<vmem>>, vector<1x8x32xf32>
    %64 = vector.shape_cast %63 : vector<1x8x32xf32> to vector<8x32xf32>
    %65 = vector.shape_cast %61 : vector<8x32xf32> to vector<1x8x32xf32>
    tpu.vector_store %arg10[%62, %c0_25, %c0_26], %65 {strides = array<i32>} : memref<1x8x32xf32, #tpu.memory_space<vmem>>, vector<1x8x32xf32>,
    %c1_i32 = arith.constant 1 : i32
    return
  }
  func.func @transform_0(%arg0: i32) -> (i32, i32, i32) {
    %c0_i32 = arith.constant 0 : i32
    %c0_i32_0 = arith.constant 0 : i32
    %c0_i32_1 = arith.constant 0 : i32
    return %arg0, %c0_i32, %c0_i32_0 : i32, i32, i32
  }
  func.func @transform_1(%arg0: i32) -> (i32, i32) {
    %c0_i32 = arith.constant 0 : i32
    %c0_i32_0 = arith.constant 0 : i32
    %c0_i32_1 = arith.constant 0 : i32
    return %c0_i32, %c0_i32_0 : i32, i32
  }
  func.func @transform_2(%arg0: i32) -> (i32, i32) {
    %c0_i32 = arith.constant 0 : i32
    %c0_i32_0 = arith.constant 0 : i32
    %c0_i32_1 = arith.constant 0 : i32
    return %c0_i32, %c0_i32_0 : i32, i32
  }
  func.func @transform_3(%arg0: i32) -> (i32, i32) {
    %c0_i32 = arith.constant 0 : i32
    %c0_i32_0 = arith.constant 0 : i32
    %c0_i32_1 = arith.constant 0 : i32
    return %c0_i32, %c0_i32_0 : i32, i32
  }
  func.func @transform_4(%arg0: i32) -> (i32, i32) {
    %c0_i32 = arith.constant 0 : i32
    %c0_i32_0 = arith.constant 0 : i32
    %c0_i32_1 = arith.constant 0 : i32
    return %c0_i32, %c0_i32_0 : i32, i32
  }
  func.func @transform_5(%arg0: i32) -> (i32, i32) {
    %c0_i32 = arith.constant 0 : i32
    %c0_i32_0 = arith.constant 0 : i32
    %c0_i32_1 = arith.constant 0 : i32
    return %c0_i32, %c0_i32_0 : i32, i32
  }
  func.func @transform_6(%arg0: i32) -> (i32, i32) {
    %c0_i32 = arith.constant 0 : i32
    %c0_i32_0 = arith.constant 0 : i32
    %c0_i32_1 = arith.constant 0 : i32
    return %c0_i32, %c0_i32_0 : i32, i32
  }
  func.func @transform_7(%arg0: i32) -> (i32, i32) {
    %c0_i32 = arith.constant 0 : i32
    %c0_i32_0 = arith.constant 0 : i32
    %c0_i32_1 = arith.constant 0 : i32
    return %c0_i32, %c0_i32_0 : i32, i32
  }
  func.func @transform_8(%arg0: i32) -> (i32, i32) {
    %c0_i32 = arith.constant 0 : i32
    %c0_i32_0 = arith.constant 0 : i32
    %c0_i32_1 = arith.constant 0 : i32
    return %c0_i32, %c0_i32_0 : i32, i32
  }
  func.func @transform_9(%arg0: i32) -> (i32, i32, i32) {
    %c0_i32 = arith.constant 0 : i32
    %c0_i32_0 = arith.constant 0 : i32
    %c0_i32_1 = arith.constant 0 : i32
    return %arg0, %c0_i32, %c0_i32_0 : i32, i32, i32
  }
}

module attributes {stable_mosaic.version = 11 : i64} {
  func.func @freq_attn_kernel(%arg0: i32, %arg1: memref<1x8x32xbf16, #tpu.memory_space<vmem>>, %arg2: memref<32x96xbf16, #tpu.memory_space<vmem>>, %arg3: memref<1x96xf32, #tpu.memory_space<vmem>>, %arg4: memref<32x32xbf16, #tpu.memory_space<vmem>>, %arg5: memref<1x32xf32, #tpu.memory_space<vmem>>, %arg6: memref<16x8xbf16, #tpu.memory_space<vmem>>, %arg7: memref<8x8xbf16, #tpu.memory_space<vmem>>, %arg8: memref<8x8xbf16, #tpu.memory_space<vmem>>, %arg9: memref<8x1xf32, #tpu.memory_space<vmem>>, %arg10: memref<1x8x32xf32, #tpu.memory_space<vmem>>) attributes {dimension_semantics = [#tpu.dimension_semantics<parallel>], iteration_bounds = array<i64: 2>, scalar_prefetch = 0 : i64, scratch_operands = 0 : i64, tpu.core_type = #tpu.core_type<tc>, window_params = [{transform_indices = @transform_0, window_bounds = array<i64: 1, 8, 32>}, {pipeline_mode = #tpu.pipeline_mode<synchronous>, transform_indices = @transform_1, window_bounds = array<i64: 32, 96>}, {pipeline_mode = #tpu.pipeline_mode<synchronous>, transform_indices = @transform_2, window_bounds = array<i64: 1, 96>}, {pipeline_mode = #tpu.pipeline_mode<synchronous>, transform_indices = @transform_3, window_bounds = array<i64: 32, 32>}, {pipeline_mode = #tpu.pipeline_mode<synchronous>, transform_indices = @transform_4, window_bounds = array<i64: 1, 32>}, {pipeline_mode = #tpu.pipeline_mode<synchronous>, transform_indices = @transform_5, window_bounds = array<i64: 16, 8>}, {pipeline_mode = #tpu.pipeline_mode<synchronous>, transform_indices = @transform_6, window_bounds = array<i64: 8, 8>}, {pipeline_mode = #tpu.pipeline_mode<synchronous>, transform_indices = @transform_7, window_bounds = array<i64: 8, 8>}, {pipeline_mode = #tpu.pipeline_mode<synchronous>, transform_indices = @transform_8, window_bounds = array<i64: 8, 1>}, {transform_indices = @transform_9, window_bounds = array<i64: 1, 8, 32>}]} {
    %c0 = arith.constant 0 : index
    %c0_0 = arith.constant 0 : index
    %0 = vector.load %arg2[%c0, %c0_0] : memref<32x96xbf16, #tpu.memory_space<vmem>>, vector<32x96xbf16>
    %c0_1 = arith.constant 0 : index
    %c0_2 = arith.constant 0 : index
    %1 = vector.load %arg4[%c0_1, %c0_2] : memref<32x32xbf16, #tpu.memory_space<vmem>>, vector<32x32xbf16>
    %c0_3 = arith.constant 0 : index
    %c0_4 = arith.constant 0 : index
    %2 = vector.load %arg5[%c0_3, %c0_4] : memref<1x32xf32, #tpu.memory_space<vmem>>, vector<1x32xf32>
    %c0_5 = arith.constant 0 : index
    %c0_6 = arith.constant 0 : index
    %3 = vector.load %arg6[%c0_5, %c0_6] : memref<16x8xbf16, #tpu.memory_space<vmem>>, vector<16x8xbf16>
    %c0_7 = arith.constant 0 : index
    %c0_8 = arith.constant 0 : index
    %4 = vector.load %arg7[%c0_7, %c0_8] : memref<8x8xbf16, #tpu.memory_space<vmem>>, vector<8x8xbf16>
    %c0_9 = arith.constant 0 : index
    %c0_10 = arith.constant 0 : index
    %5 = vector.load %arg8[%c0_9, %c0_10] : memref<8x8xbf16, #tpu.memory_space<vmem>>, vector<8x8xbf16>
    %c0_11 = arith.constant 0 : index
    %c0_12 = arith.constant 0 : index
    %6 = vector.load %arg9[%c0_11, %c0_12] : memref<8x1xf32, #tpu.memory_space<vmem>>, vector<8x1xf32>
    %7 = vector.shape_cast %6 : vector<8x1xf32> to vector<8x1xf32>
    %8 = vector.broadcast %7 : vector<8x1xf32> to vector<8x32xf32>
    %9 = tpu.iota {dimensions = array<i32: 0>} : vector<16x1xi32>
    %c0_i32 = arith.constant 0 : i32
    %10 = vector.broadcast %c0_i32 : i32 to vector<16x1xi32>
    %11 = arith.cmpi eq, %9, %10 : vector<16x1xi32>
    %c0_13 = arith.constant 0 : index
    %c0_14 = arith.constant 0 : index
    %12 = vector.load %arg3[%c0_13, %c0_14] : memref<1x96xf32, #tpu.memory_space<vmem>>, vector<1x96xf32>
    %cst = arith.constant 0.000000e+00 : f32
    %13 = vector.shape_cast %11 : vector<16x1xi1> to vector<16x1xi1>
    %14 = vector.broadcast %13 : vector<16x1xi1> to vector<16x96xi1>
    %15 = vector.shape_cast %12 : vector<1x96xf32> to vector<1x96xf32>
    %16 = vector.broadcast %15 : vector<1x96xf32> to vector<16x96xf32>
    %17 = vector.broadcast %cst : f32 to vector<16x96xf32>
    %18 = arith.select %14, %16, %17 : vector<16x96xi1>, vector<16x96xf32>
    %c0_i32_15 = arith.constant 0 : i32
    %19 = arith.index_cast %c0_i32_15 : i32 to index
    %c0_16 = arith.constant 0 : index
    %c0_17 = arith.constant 0 : index
    %20 = vector.load %arg1[%19, %c0_16, %c0_17] : memref<1x8x32xbf16, #tpu.memory_space<vmem>>, vector<1x8x32xbf16>
    %21 = vector.shape_cast %20 : vector<1x8x32xbf16> to vector<8x32xbf16>
    %cst_18 = arith.constant dense<0.000000e+00> : vector<16x32xf32>
    %22 = tpu.matmul %3, %21, %cst_18 {dimension_numbers = #tpu.dot_dimension_numbers<[1], [0], [0], [1], [0, 0, 1, 1], [], []>} : vector<16x8xbf16>, vector<8x32xbf16>, vector<16x32xf32> -> vector<16x32xf32>
    %23 = arith.truncf %22 : vector<16x32xf32> to vector<16x32xbf16>
    %cst_19 = arith.constant dense<0.000000e+00> : vector<16x96xf32>
    %24 = tpu.matmul %23, %0, %cst_19 {dimension_numbers = #tpu.dot_dimension_numbers<[1], [0], [0], [1], [0, 0, 1, 1], [], []>} : vector<16x32xbf16>, vector<32x96xbf16>, vector<16x96xf32> -> vector<16x96xf32>
    %25 = arith.addf %24, %18 : vector<16x96xf32>
    %26 = vector.extract_strided_slice %25 {offsets = [0, 0], sizes = [8, 32], strides = [1, 1]} : vector<16x96xf32> to vector<8x32xf32>
    %27 = vector.extract_strided_slice %25 {offsets = [0, 32], sizes = [8, 32], strides = [1, 1]} : vector<16x96xf32> to vector<8x32xf32>
    %28 = vector.extract_strided_slice %25 {offsets = [0, 64], sizes = [8, 32], strides = [1, 1]} : vector<16x96xf32> to vector<8x32xf32>
    %29 = vector.extract_strided_slice %25 {offsets = [8, 0], sizes = [8, 32], strides = [1, 1]} : vector<16x96xf32> to vector<8x32xf32>
    %30 = vector.extract_strided_slice %25 {offsets = [8, 32], sizes = [8, 32], strides = [1, 1]} : vector<16x96xf32> to vector<8x32xf32>
    %31 = vector.extract_strided_slice %25 {offsets = [8, 64], sizes = [8, 32], strides = [1, 1]} : vector<16x96xf32> to vector<8x32xf32>
    %32 = arith.mulf %26, %26 : vector<8x32xf32>
    %33 = arith.mulf %29, %29 : vector<8x32xf32>
    %34 = arith.addf %32, %33 : vector<8x32xf32>
    %35 = arith.mulf %27, %27 : vector<8x32xf32>
    %36 = arith.mulf %30, %30 : vector<8x32xf32>
    %37 = arith.addf %35, %36 : vector<8x32xf32>
    %38 = arith.mulf %34, %37 : vector<8x32xf32>
    %39 = math.sqrt %38 : vector<8x32xf32>
    %cst_20 = arith.constant dense<0xFF800000> : vector<32xf32>
    %40 = vector.multi_reduction <maximumf>, %39, %cst_20 [0] : vector<8x32xf32> to vector<32xf32>
    %41 = vector.shape_cast %40 : vector<32xf32> to vector<1x32xf32>
    %42 = vector.broadcast %41 : vector<1x32xf32> to vector<8x32xf32>
    %43 = arith.subf %39, %42 : vector<8x32xf32>
    %44 = math.exp %43 : vector<8x32xf32>
    %45 = arith.mulf %44, %8 : vector<8x32xf32>
    %cst_21 = arith.constant dense<0.000000e+00> : vector<32xf32>
    %46 = vector.multi_reduction <add>, %45, %cst_21 [0] : vector<8x32xf32> to vector<32xf32>
    %47 = vector.shape_cast %46 : vector<32xf32> to vector<1x32xf32>
    %48 = tpu.reciprocal %47 {approx = true} : vector<1x32xf32> -> vector<1x32xf32>
    %49 = vector.broadcast %48 : vector<1x32xf32> to vector<8x32xf32>
    %50 = arith.mulf %44, %49 : vector<8x32xf32>
    %51 = arith.mulf %50, %28 : vector<8x32xf32>
    %52 = arith.truncf %51 : vector<8x32xf32> to vector<8x32xbf16>
    %cst_22 = arith.constant dense<0.000000e+00> : vector<8x32xf32>
    %53 = tpu.matmul %4, %52, %cst_22 {dimension_numbers = #tpu.dot_dimension_numbers<[1], [0], [0], [1], [0, 0, 1, 1], [], []>} : vector<8x8xbf16>, vector<8x32xbf16>, vector<8x32xf32> -> vector<8x32xf32>
    %54 = arith.mulf %50, %31 : vector<8x32xf32>
    %55 = arith.truncf %54 : vector<8x32xf32> to vector<8x32xbf16>
    %cst_23 = arith.constant dense<0.000000e+00> : vector<8x32xf32>
    %56 = tpu.matmul %5, %55, %cst_23 {dimension_numbers = #tpu.dot_dimension_numbers<[1], [0], [0], [1], [0, 0, 1, 1], [], []>} : vector<8x8xbf16>, vector<8x32xbf16>, vector<8x32xf32> -> vector<8x32xf32>
    %57 = arith.addf %53, %56 : vector<8x32xf32>
    %58 = arith.truncf %57 : vector<8x32xf32> to vector<8x32xbf16>
    %cst_24 = arith.constant dense<0.000000e+00> : vector<8x32xf32>
    %59 = tpu.matmul %58, %1, %cst_24 {dimension_numbers = #tpu.dot_dimension_numbers<[1], [0], [0], [1], [0, 0, 1, 1], [], []>} : vector<8x32xbf16>, vector<32x32xbf16>, vector<8x32xf32> -> vector<8x32xf32>
    %60 = vector.broadcast %2 : vector<1x32xf32> to vector<8x32xf32>
    %61 = arith.addf %59, %60 : vector<8x32xf32>
    %62 = arith.index_cast %c0_i32_15 : i32 to index
    %c0_25 = arith.constant 0 : index
    %c0_26 = arith.constant 0 : index
    %63 = vector.load %arg10[%62, %c0_25, %c0_26] : memref<1x8x32xf32, #tpu.memory_space<vmem>>, vector<1x8x32xf32>
    %64 = vector.shape_cast %63 : vector<1x8x32xf32> to vector<8x32xf32>
    %65 = vector.shape_cast %61 : vector<8x32xf32> to vector<1x8x32xf32>
    tpu.vector_store %arg10[%62, %c0_25, %c0_26], %65 {strides = array<i32>} : memref<1x8x32xf32, #tpu.memory_space<vmem>>, vector<1x8x32xf32>,
    %c1_i32 = arith.constant 1 : i32
    return
  }
  func.func @transform_0(%arg0: i32) -> (i32, i32, i32) {
    %c0_i32 = arith.constant 0 : i32
    %c0_i32_0 = arith.constant 0 : i32
    %c0_i32_1 = arith.constant 0 : i32
    return %arg0, %c0_i32, %c0_i32_0 : i32, i32, i32
  }
  func.func @transform_1(%arg0: i32) -> (i32, i32) {
    %c0_i32 = arith.constant 0 : i32
    %c0_i32_0 = arith.constant 0 : i32
    %c0_i32_1 = arith.constant 0 : i32
    return %c0_i32, %c0_i32_0 : i32, i32
  }
  func.func @transform_2(%arg0: i32) -> (i32, i32) {
    %c0_i32 = arith.constant 0 : i32
    %c0_i32_0 = arith.constant 0 : i32
    %c0_i32_1 = arith.constant 0 : i32
    return %c0_i32, %c0_i32_0 : i32, i32
  }
  func.func @transform_3(%arg0: i32) -> (i32, i32) {
    %c0_i32 = arith.constant 0 : i32
    %c0_i32_0 = arith.constant 0 : i32
    %c0_i32_1 = arith.constant 0 : i32
    return %c0_i32, %c0_i32_0 : i32, i32
  }
  func.func @transform_4(%arg0: i32) -> (i32, i32) {
    %c0_i32 = arith.constant 0 : i32
    %c0_i32_0 = arith.constant 0 : i32
    %c0_i32_1 = arith.constant 0 : i32
    return %c0_i32, %c0_i32_0 : i32, i32
  }
  func.func @transform_5(%arg0: i32) -> (i32, i32) {
    %c0_i32 = arith.constant 0 : i32
    %c0_i32_0 = arith.constant 0 : i32
    %c0_i32_1 = arith.constant 0 : i32
    return %c0_i32, %c0_i32_0 : i32, i32
  }
  func.func @transform_6(%arg0: i32) -> (i32, i32) {
    %c0_i32 = arith.constant 0 : i32
    %c0_i32_0 = arith.constant 0 : i32
    %c0_i32_1 = arith.constant 0 : i32
    return %c0_i32, %c0_i32_0 : i32, i32
  }
  func.func @transform_7(%arg0: i32) -> (i32, i32) {
    %c0_i32 = arith.constant 0 : i32
    %c0_i32_0 = arith.constant 0 : i32
    %c0_i32_1 = arith.constant 0 : i32
    return %c0_i32, %c0_i32_0 : i32, i32
  }
  func.func @transform_8(%arg0: i32) -> (i32, i32) {
    %c0_i32 = arith.constant 0 : i32
    %c0_i32_0 = arith.constant 0 : i32
    %c0_i32_1 = arith.constant 0 : i32
    return %c0_i32, %c0_i32_0 : i32, i32
  }
  func.func @transform_9(%arg0: i32) -> (i32, i32, i32) {
    %c0_i32 = arith.constant 0 : i32
    %c0_i32_0 = arith.constant 0 : i32
    %c0_i32_1 = arith.constant 0 : i32
    return %arg0, %c0_i32, %c0_i32_0 : i32, i32, i32
  }
}

</mosaic_0001>

<llo_original>
// kernel: tpu_custom_call.1
$region0: #{tpu_custom_call.1}
  #allocation0 [shape = 'u32[]', space=smem, size = 0x4, offset = 0x4, fixed_abs, tag = 'smem constant byte address 0x4 - core index']
  #allocation1 [shape = 'u32[72,128]{1,0:T(1,128)}', space=vmem, size = 0x9000, scoped, tag = 'internal scratch']
  %s0 = inlined_call_operand.hbm [shape: bf16[2,8,32], index: 0, kind: input, shape index: {}]
  %s1 = inlined_call_operand.vmem [shape: bf16[32,96], index: 1, kind: input, shape index: {}]
  %s2 = inlined_call_operand.hbm [shape: f32[1,96], index: 2, kind: input, shape index: {}]
  %s3 = inlined_call_operand.hbm [shape: bf16[32,32], index: 3, kind: input, shape index: {}]
  %s4 = inlined_call_operand.hbm [shape: f32[1,32], index: 4, kind: input, shape index: {}]
  %s5 = inlined_call_operand.vmem [shape: bf16[16,8], index: 5, kind: input, shape index: {}]
  %s6 = inlined_call_operand.vmem [shape: bf16[8,8], index: 6, kind: input, shape index: {}]
  %s7 = inlined_call_operand.hbm [shape: bf16[8,8], index: 7, kind: input, shape index: {}]
  %s8 = inlined_call_operand.vmem [shape: f32[8,1], index: 8, kind: input, shape index: {}]
  %s9 = inlined_call_operand.hbm [shape: f32[2,8,32], index: 9, kind: output, shape index: {}]
  %s10 = sld [smem:[#allocation0]]
  $region89: #{tpu_custom_call.1} parent=0
    _
  %s12 = ssub.s32 1, %s10
  %s13 = scalar_select 0, %s12, %s10
  $region1: #{tpu_custom_call.1} parent=0
    #allocation2 [shape = 'u8[4096]{0}', space=vmem, size = 0x1000, scoped, tag = 'input window, operand 0']
    #allocation3 [shape = 's32[2]{0}', space=sflag, size = 0x8, scoped, tag = 'scoped memory for tpu_custom_call.1']
    #allocation4 [shape = 's32[2]{0}', space=sflag, size = 0x8, scoped, tag = 'scoped memory for tpu_custom_call.1']
    #allocation5 [shape = 'u8[512]{0}', space=vmem, size = 0x400, scoped, tag = 'input window, operand 2, single buffered']
    #allocation6 [shape = 's32[1]{0}', space=sflag, size = 0x4, scoped, tag = 'scoped memory for tpu_custom_call.1']
    #allocation7 [shape = 'u8[8192]{0}', space=vmem, size = 0x2000, scoped, tag = 'input window, operand 3, single buffered']
    #allocation8 [shape = 'u8[512]{0}', space=vmem, size = 0x400, scoped, tag = 'input window, operand 4, single buffered']
    #allocation9 [shape = 's32[1]{0}', space=sflag, size = 0x4, scoped, tag = 'scoped memory for tpu_custom_call.1']
    #allocation10 [shape = 'u8[2048]{0}', space=vmem, size = 0x800, scoped, tag = 'input window, operand 7, single buffered']
    #allocation11 [shape = 'u8[8192]{0}', space=vmem, size = 0x2000, scoped, tag = 'output window, operand 0']
    %14 = vsyncpa [#allocation3], 0
    %s15 = scalar_lea.sflag [#allocation3], 1
    %16 = vsyncpa %s15, 0
    %17 = vsyncpa [#allocation6], 0
    %18 = vsyncpa [#allocation9], 0
    %19 = vsyncpa [#allocation4], 0
    %s20 = scalar_lea.sflag [#allocation4], 1
    %21 = vsyncpa %s20, 0
    loop: start=0, step=1, limit=4
    $region2: #{tpu_custom_call.1} parent=1 // loop_pre_header
      _
    $region3: #{tpu_custom_call.1} parent=1 // loop_header
      %s23 = sphi 0, %s27
      %p24 = scmp.ge.s32.totalorder %s23, 4
      %s33 = sphi 0, %s35
      %s36 = sphi 0, %s33
      %s37 = sphi 0, %s36
      %s53 = sphi 0, %s37
      %s57 = sphi 0, %s57
      %s59 = sphi 0, %s57
      %s60 = sphi 0, %s59
      %s74 = sphi 0, %s60
      %s78 = sphi 0, %s78
      %s80 = sphi 0, %s78
      %s81 = sphi 0, %s80
      %s95 = sphi 0, %s81
      %s99 = sphi 0, %s99
      %s101 = sphi 0, %s99
      %s102 = sphi 0, %s101
      %s116 = sphi 0, %s102
      %s120 = sphi 0, %s120
      %s122 = sphi 0, %s120
      %s123 = sphi 0, %s122
      %s137 = sphi 0, %s123
      %s141 = sphi 0, %s141
      %s143 = sphi 0, %s141
      %s144 = sphi 0, %s143
      %s158 = sphi 0, %s144
      %s162 = sphi 0, %s162
      %s164 = sphi 0, %s162
      %s165 = sphi 0, %s164
      %s179 = sphi 0, %s165
      %s183 = sphi 0, %s183
      %s185 = sphi 0, %s183
      %s186 = sphi 0, %s185
      %s200 = sphi 0, %s186
      %s204 = sphi 0, %s204
      %s206 = sphi 0, %s204
      %s207 = sphi 0, %s206
      %s221 = sphi 0, %s207
      %s227 = sphi 0, %s229
      %s230 = sphi 0, %s227
      %s231 = sphi 0, %s230
      %s247 = sphi 0, %s231
    $region4: #{tpu_custom_call.1} parent=1 // loop_header_branch
      %26 = sbr.rel (%p24) target = $region8
    $region5: #{tpu_custom_call.1} parent=1 // loop_body
      %s28 = ssub.s32 %s23, 1
      %s29 = ssub.s32 %s23, 2
      %s30 = sadd.s32 %s23, 1
      %s31 = ssub.s32 %s23, %s30
      %p32 = scmp.eq.s32.totalorder %s31, 0
      %s34 = sadd.s32 %s33, 1
      %s35 = scalar_select %p32, %s33, %s34
      %p38 = pneg %p32
      %p39 = scmp.eq.s32.totalorder %s23, 1
      %p40 = por %p38, %p39
      %p41 = scmp.ne.s32.totalorder %s33, %s36
      %p42 = scmp.eq.s32.totalorder %s23, 0
      %p43 = por %p41, %p42
      %p44 = scmp.ne.s32.totalorder %s33, %s36
      %p45 = scmp.eq.s32.totalorder %s28, 1
      %p46 = por %p44, %p45
      %p47 = scmp.ne.s32.totalorder %s36, %s37
      %p48 = scmp.eq.s32.totalorder %s28, 0
      %p49 = por %p47, %p48
      %p50 = scmp.ne.s32.totalorder %s36, %s37
      %p51 = scmp.eq.s32.totalorder %s29, 1
      %p52 = por %p50, %p51
      %p54 = scmp.ne.s32.totalorder %s37, %s53
      %p55 = scmp.eq.s32.totalorder %s29, 0
      %p56 = por %p54, %p55
      %s58 = sadd.s32 %s57, 1
      %p61 = scmp.eq.s32.totalorder %s23, 1
      %p62 = scmp.ne.s32.totalorder %s57, %s59
      %p63 = scmp.eq.s32.totalorder %s23, 0
      %p64 = por %p62, %p63
      %p65 = scmp.ne.s32.totalorder %s57, %s59
      %p66 = scmp.eq.s32.totalorder %s28, 1
      %p67 = por %p65, %p66
      %p68 = scmp.ne.s32.totalorder %s59, %s60
      %p69 = scmp.eq.s32.totalorder %s28, 0
      %p70 = por %p68, %p69
      %p71 = scmp.ne.s32.totalorder %s59, %s60
      %p72 = scmp.eq.s32.totalorder %s29, 1
      %p73 = por %p71, %p72
      %p75 = scmp.ne.s32.totalorder %s60, %s74
      %p76 = scmp.eq.s32.totalorder %s29, 0
      %p77 = por %p75, %p76
      %s79 = sadd.s32 %s78, 1
      %p82 = scmp.eq.s32.totalorder %s23, 1
      %p83 = scmp.ne.s32.totalorder %s78, %s80
      %p84 = scmp.eq.s32.totalorder %s23, 0
      %p85 = por %p83, %p84
      %p86 = scmp.ne.s32.totalorder %s78, %s80
      %p87 = scmp.eq.s32.totalorder %s28, 1
      %p88 = por %p86, %p87
      %p89 = scmp.ne.s32.totalorder %s80, %s81
      %p90 = scmp.eq.s32.totalorder %s28, 0
      %p91 = por %p89, %p90
      %p92 = scmp.ne.s32.totalorder %s80, %s81
      %p93 = scmp.eq.s32.totalorder %s29, 1
      %p94 = por %p92, %p93
      %p96 = scmp.ne.s32.totalorder %s81, %s95
      %p97 = scmp.eq.s32.totalorder %s29, 0
      %p98 = por %p96, %p97
      %s100 = sadd.s32 %s99, 1
      %p103 = scmp.eq.s32.totalorder %s23, 1
      %p104 = scmp.ne.s32.totalorder %s99, %s101
      %p105 = scmp.eq.s32.totalorder %s23, 0
      %p106 = por %p104, %p105
      %p107 = scmp.ne.s32.totalorder %s99, %s101
      %p108 = scmp.eq.s32.totalorder %s28, 1
      %p109 = por %p107, %p108
      %p110 = scmp.ne.s32.totalorder %s101, %s102
      %p111 = scmp.eq.s32.totalorder %s28, 0
      %p112 = por %p110, %p111
      %p113 = scmp.ne.s32.totalorder %s101, %s102
      %p114 = scmp.eq.s32.totalorder %s29, 1
      %p115 = por %p113, %p114
      %p117 = scmp.ne.s32.totalorder %s102, %s116
      %p118 = scmp.eq.s32.totalorder %s29, 0
      %p119 = por %p117, %p118
      %s121 = sadd.s32 %s120, 1
      %p124 = scmp.eq.s32.totalorder %s23, 1
      %p125 = scmp.ne.s32.totalorder %s120, %s122
      %p126 = scmp.eq.s32.totalorder %s23, 0
      %p127 = por %p125, %p126
      %p128 = scmp.ne.s32.totalorder %s120, %s122
      %p129 = scmp.eq.s32.totalorder %s28, 1
      %p130 = por %p128, %p129
      %p131 = scmp.ne.s32.totalorder %s122, %s123
      %p132 = scmp.eq.s32.totalorder %s28, 0
      %p133 = por %p131, %p132
      %p134 = scmp.ne.s32.totalorder %s122, %s123
      %p135 = scmp.eq.s32.totalorder %s29, 1
      %p136 = por %p134, %p135
      %p138 = scmp.ne.s32.totalorder %s123, %s137
      %p139 = scmp.eq.s32.totalorder %s29, 0
      %p140 = por %p138, %p139
      %s142 = sadd.s32 %s141, 1
      %p145 = scmp.eq.s32.totalorder %s23, 1
      %p146 = scmp.ne.s32.totalorder %s141, %s143
      %p147 = scmp.eq.s32.totalorder %s23, 0
      %p148 = por %p146, %p147
      %p149 = scmp.ne.s32.totalorder %s141, %s143
      %p150 = scmp.eq.s32.totalorder %s28, 1
      %p151 = por %p149, %p150
      %p152 = scmp.ne.s32.totalorder %s143, %s144
      %p153 = scmp.eq.s32.totalorder %s28, 0
      %p154 = por %p152, %p153
      %p155 = scmp.ne.s32.totalorder %s143, %s144
      %p156 = scmp.eq.s32.totalorder %s29, 1
      %p157 = por %p155, %p156
      %p159 = scmp.ne.s32.totalorder %s144, %s158
      %p160 = scmp.eq.s32.totalorder %s29, 0
      %p161 = por %p159, %p160
      %s163 = sadd.s32 %s162, 1
      %p166 = scmp.eq.s32.totalorder %s23, 1
      %p167 = scmp.ne.s32.totalorder %s162, %s164
      %p168 = scmp.eq.s32.totalorder %s23, 0
      %p169 = por %p167, %p168
      %p170 = scmp.ne.s32.totalorder %s162, %s164
      %p171 = scmp.eq.s32.totalorder %s28, 1
      %p172 = por %p170, %p171
      %p173 = scmp.ne.s32.totalorder %s164, %s165
      %p174 = scmp.eq.s32.totalorder %s28, 0
      %p175 = por %p173, %p174
      %p176 = scmp.ne.s32.totalorder %s164, %s165
      %p177 = scmp.eq.s32.totalorder %s29, 1
      %p178 = por %p176, %p177
      %p180 = scmp.ne.s32.totalorder %s165, %s179
      %p181 = scmp.eq.s32.totalorder %s29, 0
      %p182 = por %p180, %p181
      %s184 = sadd.s32 %s183, 1
      %p187 = scmp.eq.s32.totalorder %s23, 1
      %p188 = scmp.ne.s32.totalorder %s183, %s185
      %p189 = scmp.eq.s32.totalorder %s23, 0
      %p190 = por %p188, %p189
      %p191 = scmp.ne.s32.totalorder %s183, %s185
      %p192 = scmp.eq.s32.totalorder %s28, 1
      %p193 = por %p191, %p192
      %p194 = scmp.ne.s32.totalorder %s185, %s186
      %p195 = scmp.eq.s32.totalorder %s28, 0
      %p196 = por %p194, %p195
      %p197 = scmp.ne.s32.totalorder %s185, %s186
      %p198 = scmp.eq.s32.totalorder %s29, 1
      %p199 = por %p197, %p198
      %p201 = scmp.ne.s32.totalorder %s186, %s200
      %p202 = scmp.eq.s32.totalorder %s29, 0
      %p203 = por %p201, %p202
      %s205 = sadd.s32 %s204, 1
      %p208 = scmp.eq.s32.totalorder %s23, 1
      %p209 = scmp.ne.s32.totalorder %s204, %s206
      %p210 = scmp.eq.s32.totalorder %s23, 0
      %p211 = por %p209, %p210
      %p212 = scmp.ne.s32.totalorder %s204, %s206
      %p213 = scmp.eq.s32.totalorder %s28, 1
      %p214 = por %p212, %p213
      %p215 = scmp.ne.s32.totalorder %s206, %s207
      %p216 = scmp.eq.s32.totalorder %s28, 0
      %p217 = por %p215, %p216
      %p218 = scmp.ne.s32.totalorder %s206, %s207
      %p219 = scmp.eq.s32.totalorder %s29, 1
      %p220 = por %p218, %p219
      %p222 = scmp.ne.s32.totalorder %s207, %s221
      %p223 = scmp.eq.s32.totalorder %s29, 0
      %p224 = por %p222, %p223
      %s225 = ssub.s32 %s23, %s30
      %p226 = scmp.eq.s32.totalorder %s225, 0
      %s228 = sadd.s32 %s227, 1
      %s229 = scalar_select %p226, %s227, %s228
      %p232 = pneg %p226
      %p233 = scmp.eq.s32.totalorder %s23, 1
      %p234 = por %p232, %p233
      %p235 = scmp.ne.s32.totalorder %s227, %s230
      %p236 = scmp.eq.s32.totalorder %s23, 0
      %p237 = por %p235, %p236
      %p238 = scmp.ne.s32.totalorder %s227, %s230
      %p239 = scmp.eq.s32.totalorder %s28, 1
      %p240 = por %p238, %p239
      %p241 = scmp.ne.s32.totalorder %s230, %s231
      %p242 = scmp.eq.s32.totalorder %s28, 0
      %p243 = por %p241, %p242
      %p244 = scmp.ne.s32.totalorder %s230, %s231
      %p245 = scmp.eq.s32.totalorder %s29, 1
      %p246 = por %p244, %p245
      %p248 = scmp.ne.s32.totalorder %s231, %s247
      %p249 = scmp.eq.s32.totalorder %s29, 0
      %p250 = por %p248, %p249
      %p251 = scmp.le.s32.totalorder 1, %s23
      %p252 = scmp.lt.s32.totalorder %s23, 3
      %p253 = pnand %p251, %p252
      %p254 = pneg %p253
      // Predicated region
      $region9: #{tpu_custom_call.1} parent=5 // pred_check
        _
      $region10: #{tpu_custom_call.1} parent=5 // pred_check_branch
        %256 = sbr.rel (%p253) target = $region12
      $region11: #{tpu_custom_call.1} parent=5 // pred_region
        %s257 = ssub.s32 %s23, 1
        // Predicated region
        $region13: #{tpu_custom_call.1} parent=11 // pred_check
          %p258 = pneg %p70
        $region14: #{tpu_custom_call.1} parent=11 // pred_check_branch
          %260 = sbr.rel (%p258) target = $region16
        $region15: #{tpu_custom_call.1} parent=11 // pred_region
          _
        $region16: #{tpu_custom_call.1} parent=11 // pred_fallthru
          _
        // Predicated region
        $region17: #{tpu_custom_call.1} parent=11 // pred_check
          %p261 = pneg %p91
        $region18: #{tpu_custom_call.1} parent=11 // pred_check_branch
          %263 = sbr.rel (%p261) target = $region20
        $region19: #{tpu_custom_call.1} parent=11 // pred_region
          %265 = vsyncadd [#allocation6], 0
          %s267 = sshll.u32 %s2, 4
          %s268 = int_to_ptr.hbm [resolvable:$true] %s267
          %s269 = sshll.u32 [#allocation5], 4
          %s270 = int_to_ptr.vmem [resolvable:$true] %s269
          %272 = dma.hbm_to_vmem [thread:$0]  %s268, 16, %s270, [#allocation6]
        $region20: #{tpu_custom_call.1} parent=11 // pred_fallthru
          _
        // Predicated region
        $region21: #{tpu_custom_call.1} parent=11 // pred_check
          %p273 = pneg %p112
        $region22: #{tpu_custom_call.1} parent=11 // pred_check_branch
          %275 = sbr.rel (%p273) target = $region24
        $region23: #{tpu_custom_call.1} parent=11 // pred_region
          %277 = vsyncadd [#allocation6], 0
          %s278 = sshll.u32 %s3, 4
          %s279 = int_to_ptr.hbm [resolvable:$true] %s278
          %s280 = sshll.u32 [#allocation7], 4
          %s281 = int_to_ptr.vmem [resolvable:$true] %s280
          %286 = dma.hbm_to_vmem [thread:$0]  %s279, 256, %s281, [#allocation6], 64, 64, 4
        $region24: #{tpu_custom_call.1} parent=11 // pred_fallthru
          _
        // Predicated region
        $region25: #{tpu_custom_call.1} parent=11 // pred_check
          %p287 = pneg %p133
        $region26: #{tpu_custom_call.1} parent=11 // pred_check_branch
          %289 = sbr.rel (%p287) target = $region28
        $region27: #{tpu_custom_call.1} parent=11 // pred_region
          %291 = vsyncadd [#allocation9], 0
          %s293 = sshll.u32 %s4, 4
          %s294 = int_to_ptr.hbm [resolvable:$true] %s293
          %s295 = sshll.u32 [#allocation8], 4
          %s296 = int_to_ptr.vmem [resolvable:$true] %s295
          %298 = dma.hbm_to_vmem [thread:$0]  %s294, 16, %s296, [#allocation9]
        $region28: #{tpu_custom_call.1} parent=11 // pred_fallthru
          _
        // Predicated region
        $region29: #{tpu_custom_call.1} parent=11 // pred_check
          %p299 = pneg %p154
        $region30: #{tpu_custom_call.1} parent=11 // pred_check_branch
          %301 = sbr.rel (%p299) target = $region32
        $region31: #{tpu_custom_call.1} parent=11 // pred_region
          _
        $region32: #{tpu_custom_call.1} parent=11 // pred_fallthru
          _
        // Predicated region
        $region33: #{tpu_custom_call.1} parent=11 // pred_check
          %p302 = pneg %p175
        $region34: #{tpu_custom_call.1} parent=11 // pred_check_branch
          %304 = sbr.rel (%p302) target = $region36
        $region35: #{tpu_custom_call.1} parent=11 // pred_region
          _
        $region36: #{tpu_custom_call.1} parent=11 // pred_fallthru
          _
        // Predicated region
        $region37: #{tpu_custom_call.1} parent=11 // pred_check
          %p305 = pneg %p196
        $region38: #{tpu_custom_call.1} parent=11 // pred_check_branch
          %307 = sbr.rel (%p305) target = $region40
        $region39: #{tpu_custom_call.1} parent=11 // pred_region
          %309 = vsyncadd [#allocation9], 0
          %s311 = sshll.u32 %s7, 4
          %s312 = int_to_ptr.hbm [resolvable:$true] %s311
          %s313 = sshll.u32 [#allocation10], 4
          %s314 = int_to_ptr.vmem [resolvable:$true] %s313
          %316 = dma.hbm_to_vmem [thread:$0]  %s312, 64, %s314, [#allocation9]
        $region40: #{tpu_custom_call.1} parent=11 // pred_fallthru
          _
        // Predicated region
        $region41: #{tpu_custom_call.1} parent=11 // pred_check
          %p317 = pneg %p217
        $region42: #{tpu_custom_call.1} parent=11 // pred_check_branch
          %319 = sbr.rel (%p317) target = $region44
        $region43: #{tpu_custom_call.1} parent=11 // pred_region
          _
        $region44: #{tpu_custom_call.1} parent=11 // pred_fallthru
          _
      $region12: #{tpu_custom_call.1} parent=5 // pred_fallthru
        _
      %p320 = scmp.lt.s32.totalorder %s23, 2
      // Predicated region
      $region45: #{tpu_custom_call.1} parent=5 // pred_check
        %p321 = pneg %p320
      $region46: #{tpu_custom_call.1} parent=5 // pred_check_branch
        %323 = sbr.rel (%p321) target = $region48
      $region47: #{tpu_custom_call.1} parent=5 // pred_region
        // Predicated region
        $region49: #{tpu_custom_call.1} parent=47 // pred_check
          %p324 = pneg %p43
        $region50: #{tpu_custom_call.1} parent=47 // pred_check_branch
          %326 = sbr.rel (%p324) target = $region52
        $region51: #{tpu_custom_call.1} parent=47 // pred_region
          %s327 = sand.u32 %s33, 1
          %s328 = scalar_lea.sflag [#allocation3], %s327
          %s329 = sand.u32 %s33, 1
          %s330 = smul.addr %s329, 4
          %s331 = scalar_lea.vmem [#allocation2], %s330
          %333 = vsyncadd %s328, 0
          %s334 = smul.addr %s23, 4
          %s335 = scalar_lea.hbm %s0, %s334
          %s337 = sshll.u32 %s335, 4
          %s338 = int_to_ptr.hbm [resolvable:$true] %s337
          %s339 = sshll.u32 %s331, 4
          %s340 = int_to_ptr.vmem [resolvable:$true] %s339
          %342 = dma.hbm_to_vmem [thread:$0]  %s338, 64, %s340, %s328
        $region52: #{tpu_custom_call.1} parent=47 // pred_fallthru
          _
      $region48: #{tpu_custom_call.1} parent=5 // pred_fallthru
        _
      %p343 = scmp.le.s32.totalorder 1, %s23
      %p344 = scmp.lt.s32.totalorder %s23, 3
      %p345 = pnand %p343, %p344
      %p346 = pneg %p345
      // Predicated region
      $region53: #{tpu_custom_call.1} parent=5 // pred_check
        _
      $region54: #{tpu_custom_call.1} parent=5 // pred_check_branch
        %348 = sbr.rel (%p345) target = $region56
      $region55: #{tpu_custom_call.1} parent=5 // pred_region
        %s349 = ssub.s32 %s23, 1
        %s350 = sand.u32 %s36, 1
        %s351 = scalar_lea.sflag [#allocation3], %s350
        %s352 = sand.u32 %s36, 1
        %s353 = smul.addr %s352, 4
        %s354 = scalar_lea.vmem [#allocation2], %s353
        // Predicated region
        $region57: #{tpu_custom_call.1} parent=55 // pred_check
          %p355 = pneg %p49
        $region58: #{tpu_custom_call.1} parent=55 // pred_check_branch
          %357 = sbr.rel (%p355) target = $region60
        $region59: #{tpu_custom_call.1} parent=55 // pred_region
          %359 = dma.done %s351, 64
        $region60: #{tpu_custom_call.1} parent=55 // pred_fallthru
          _
        // Predicated region
        $region61: #{tpu_custom_call.1} parent=55 // pred_check
          %p360 = pneg %p91
        $region62: #{tpu_custom_call.1} parent=55 // pred_check_branch
          %362 = sbr.rel (%p360) target = $region64
        $region63: #{tpu_custom_call.1} parent=55 // pred_region
          %364 = dma.done [#allocation6], 16
        $region64: #{tpu_custom_call.1} parent=55 // pred_fallthru
          _
        // Predicated region
        $region65: #{tpu_custom_call.1} parent=55 // pred_check
          %p365 = pneg %p112
        $region66: #{tpu_custom_call.1} parent=55 // pred_check_branch
          %367 = sbr.rel (%p365) target = $region68
        $region67: #{tpu_custom_call.1} parent=55 // pred_region
          %369 = dma.done [#allocation6], 256
        $region68: #{tpu_custom_call.1} parent=55 // pred_fallthru
          _
        // Predicated region
        $region69: #{tpu_custom_call.1} parent=55 // pred_check
          %p370 = pneg %p133
        $region70: #{tpu_custom_call.1} parent=55 // pred_check_branch
          %372 = sbr.rel (%p370) target = $region72
        $region71: #{tpu_custom_call.1} parent=55 // pred_region
          %374 = dma.done [#allocation9], 16
        $region72: #{tpu_custom_call.1} parent=55 // pred_fallthru
          _
        // Predicated region
        $region73: #{tpu_custom_call.1} parent=55 // pred_check
          %p375 = pneg %p196
        $region74: #{tpu_custom_call.1} parent=55 // pred_check_branch
          %377 = sbr.rel (%p375) target = $region76
        $region75: #{tpu_custom_call.1} parent=55 // pred_region
          %379 = dma.done [#allocation9], 64
        $region76: #{tpu_custom_call.1} parent=55 // pred_fallthru
          _
        %s380 = sand.u32 %s36, 1
        %s381 = scalar_lea.sflag [#allocation3], %s380
        %s382 = sand.u32 %s36, 1
        %s383 = smul.addr %s382, 4
        %s384 = scalar_lea.vmem [#allocation2], %s383
        %p385 = pneg %p49
        %p386 = pneg %p46
        %p387 = pneg %p70
        %p388 = pneg %p67
        %p389 = pneg %p91
        %p390 = pneg %p88
        %p391 = pneg %p112
        %p392 = pneg %p109
        %p393 = pneg %p133
        %p394 = pneg %p130
        %p395 = pneg %p154
        %p396 = pneg %p151
        %p397 = pneg %p175
        %p398 = pneg %p172
        %p399 = pneg %p196
        %p400 = pneg %p193
        %p401 = pneg %p217
        %p402 = pneg %p214
        %p403 = pneg %p243
        %p404 = pneg %p240
        %s405 = sand.u32 %s230, 1
        %s406 = scalar_lea.sflag [#allocation4], %s405
        %s407 = sand.u32 %s230, 1
        %s408 = smul.addr %s407, 8
        %s409 = scalar_lea.vmem [#allocation11], %s408
        %v411 = vld [vmem:[%s1] sm:$0xf]
        %v412 = vld [vmem:[%s1 + $0x4] sm:$0xf]
        %v413 = vld [vmem:[%s1 + $0x8] sm:$0xf]
        %v414 = vld [vmem:[%s1 + $0xc] sm:$0xf]
        %v415 = vld [vmem:[#allocation7] sm:$0xf]
        %v416 = vld [vmem:[#allocation7 + $0x4] sm:$0xf]
        %v417 = vld [vmem:[#allocation7 + $0x8] sm:$0xf]
        %v418 = vld [vmem:[#allocation7 + $0xc] sm:$0xf]
        %v419 = vld [vmem:[#allocation8] sm:$0x1]
        %v420 = vld [vmem:[%s5] sm:$0xf]
        %v421 = vld [vmem:[%s5 + $0x4] sm:$0xf]
        %v422 = vld [vmem:[%s6] sm:$0xf]
        %v423 = vld [vmem:[#allocation10] sm:$0xf]
        %v424 = vld [vmem:[%s8] sm:$0xff]
        %426 = vset.pattern.permute.xlu0 0
        %427 = vperm.xlu0 %426, %v424
        %v428 = vpop.permute.xlu0 %427
        %v430 = vlaneseq
        %v431 = vshrl.u32 %v430, 7
        %v432 = vadd.s32 %v431, 8
        %vm433 = vcmp.eq.s32.totalorder %v431, 0
        %vm434 = vcmp.eq.s32.totalorder %v432, 0
        %v435 = vld [vmem:[#allocation5] sm:$0x1]
        %v436 = vsel %vm433, 1, 0
        %v437 = vsel %vm434, 1, 0
        %vm438 = vcmp.eq.s32.totalorder %v436, 1
        %vm439 = vcmp.eq.s32.totalorder %v437, 1
        %v441 = vperm.slane %v435, 0
        %v443 = vsel %vm438, %v441, 0.0
        %v444 = vsel %vm439, %v441, 0.0
        %v445 = vld [vmem:[%s354] sm:$0xf]
        %v448 = vunpack.c.l.b16 %v420
        %v449 = vunpack.c.l.b16 %v421
        %v450 = vpack.c.b16 %v449, %v448
        %vm451 = vcmask 64512
        %v453 = vsel %vm451, %v450, 0
        %vm455 = vcmask 1043456
        %v457 = vsel %vm455, %v445, 0
        %459 = vmatpush.bf16.msra.mxu0 0
        %460 = vmatpush.bf16.msra.mxu0 0
        %461 = vmatpush.bf16.msra.mxu0 0
        %462 = vmatpush.bf16.msra.mxu0 0
        %463 = vmatpush.bf16.msra.mxu0 0
        %464 = vmatpush.bf16.msra.mxu0 0
        %465 = vmatpush.bf16.msra.mxu0 0
        %466 = vmatpush.bf16.msra.mxu0 %v457
        %467 = vmatmul.bf16.gmra.mxu0 %v453
        %v468 = vpop.f32.mrf.mxu0
        %v469 = vadd.f32 0.0, %v468
        %v470 = vpop.f32.mrf.mxu0
        %v471 = vadd.f32 0.0, %v470
        %472 = vdwg.mxu0
        %v473 = vpack.c.bf16 %v471, %v469
        %v478 = vunpack.c.l.b16 %v411
        %v479 = vunpack.c.l.b16 %v412
        %v480 = vunpack.c.l.b16 %v413
        %v481 = vunpack.c.l.b16 %v414
        %v482 = vpack.c.b16 %v479, %v478
        %v483 = vpack.c.b16 %v481, %v480
        %vm486 = vcmask 261120
        %v488 = vsel %vm486, %v473, 0
        %490 = vmatpush.bf16.msra.mxu0 0
        %491 = vmatpush.bf16.msra.mxu0 0
        %492 = vmatpush.bf16.msra.mxu0 0
        %493 = vmatpush.bf16.msra.mxu0 0
        %494 = vmatpush.bf16.msra.mxu0 0
        %495 = vmatpush.bf16.msra.mxu0 0
        %496 = vmatpush.bf16.msra.mxu0 %v483
        %497 = vmatpush.bf16.msra.mxu0 %v482
        %498 = vmatmul.bf16.gmra.mxu0 %v488
        %v499 = vpop.f32.mrf.mxu0
        %v500 = vadd.f32 %v443, %v499
        %v501 = vpop.f32.mrf.mxu0
        %v502 = vadd.f32 %v444, %v501
        %503 = vdwg.mxu0
        %v504 = vmul.f32 %v500, %v500
        %v505 = vmul.f32 %v502, %v502
        %v506 = vadd.f32 %v504, %v505
        %508 = vrot.lane.b32.xlu0 %v506, 96
        %v509 = vpop.permute.xlu0 %508
        %v511 = vmul.f32 %v506, %v509
        %v512 = vrsqrt.pop %v511
        %v513 = vmul.f32 %v512, %v511
        %v514 = vmul.f32 %v513, %v512
        %v515 = vmul.f32 0.5, %v514
        %v516 = vsub.f32 1.5, %v515
        %v517 = vmul.f32 %v512, %v516
        %v518 = vmul.f32 %v511, %v517
        %vm519 = vcmp.eq.f32.partialorder %v511, inf
        %v520 = vsel %vm519, %v511, %v518
        %vm521 = vcmp.eq.f32.partialorder %v511, 0.0
        %v522 = vand.u32 %v511, 2147483648
        %v523 = vsel %vm521, %v522, %v520
        %v524 = vsel %vm486, %v523, -inf
        %v525 = vrot.slane %v524, 4
        %v526 = vmax.f32 %v524, %v525
        %v527 = vrot.slane %v526, 2
        %v528 = vmax.f32 %v526, %v527
        %v529 = vrot.slane %v528, 1
        %v530 = vmax.f32 %v528, %v529
        %v531 = vsub.f32 %v523, %v530
        %v532 = vmul.f32 %v531, 1.442695
        %v533 = vpow.pop %v532
        %v534 = vmul.f32 %v533, %v428
        %v535 = vsel %vm486, %v534, 0.0
        %v536 = vrot.slane %v535, 4
        %v537 = vadd.f32 %v535, %v536
        %v538 = vrot.slane %v537, 2
        %v539 = vadd.f32 %v537, %v538
        %v540 = vrot.slane %v539, 1
        %v541 = vadd.f32 %v539, %v540
        %v542 = vrcp.pop %v541
        %v543 = vmul.f32 %v533, %v542
        %545 = vrot.lane.b32.xlu0 %v500, 64
        %v546 = vpop.permute.xlu0 %545
        %v548 = vmul.f32 %v543, %v546
        %v549 = vpack.c.bf16 %v548, %v548
        %551 = vrot.lane.b32.xlu0 %v502, 64
        %v552 = vpop.permute.xlu0 %551
        %v554 = vmul.f32 %v543, %v552
        %v555 = vpack.c.bf16 %v554, %v554
        %v557 = vsel %vm451, %v423, 0
        %v560 = vsel %vm455, %v555, 0
        %562 = vmatpush.bf16.msra.mxu0 0
        %563 = vmatpush.bf16.msra.mxu0 0
        %564 = vmatpush.bf16.msra.mxu0 0
        %565 = vmatpush.bf16.msra.mxu0 0
        %566 = vmatpush.bf16.msra.mxu0 0
        %567 = vmatpush.bf16.msra.mxu0 0
        %568 = vmatpush.bf16.msra.mxu0 0
        %569 = vmatpush.bf16.msra.mxu0 %v560
        %570 = vmatmul.bf16.gmra.mxu0 %v557
        %v571 = vpop.f32.mrf.mxu0
        %v572 = vadd.f32 0.0, %v571
        %v573 = vpop.f32.mrf.mxu0
        %574 = vdwg.mxu0
        %v576 = vsel %vm451, %v422, 0
        %v579 = vsel %vm455, %v549, 0
        %581 = vmatpush.bf16.msra.mxu0 0
        %582 = vmatpush.bf16.msra.mxu0 0
        %583 = vmatpush.bf16.msra.mxu0 0
        %584 = vmatpush.bf16.msra.mxu0 0
        %585 = vmatpush.bf16.msra.mxu0 0
        %586 = vmatpush.bf16.msra.mxu0 0
        %587 = vmatpush.bf16.msra.mxu0 0
        %588 = vmatpush.bf16.msra.mxu0 %v579
        %589 = vmatmul.bf16.gmra.mxu0 %v576
        %v590 = vpop.f32.mrf.mxu0
        %v591 = vadd.f32 %v572, %v590
        %v592 = vpop.f32.mrf.mxu0
        %593 = vdwg.mxu0
        %v594 = vpack.c.bf16 %v591, %v591
        %v596 = vperm.slane %v419, 0
        %v602 = vunpack.c.l.b16 %v415
        %v603 = vunpack.c.l.b16 %v416
        %v604 = vunpack.c.l.b16 %v417
        %v605 = vunpack.c.l.b16 %v418
        %v606 = vpack.c.b16 %v603, %v602
        %v607 = vpack.c.b16 %v605, %v604
        %v611 = vsel %vm486, %v594, 0
        %613 = vmatpush.bf16.msra.mxu0 0
        %614 = vmatpush.bf16.msra.mxu0 0
        %615 = vmatpush.bf16.msra.mxu0 0
        %616 = vmatpush.bf16.msra.mxu0 0
        %617 = vmatpush.bf16.msra.mxu0 0
        %618 = vmatpush.bf16.msra.mxu0 0
        %619 = vmatpush.bf16.msra.mxu0 %v607
        %620 = vmatpush.bf16.msra.mxu0 %v606
        %621 = vmatmul.bf16.gmra.mxu0 %v611
        %v622 = vpop.f32.mrf.mxu0
        %v623 = vadd.f32 %v596, %v622
        %v624 = vpop.f32.mrf.mxu0
        %625 = vdwg.mxu0
        %626 = vst.msk [vmem:[%s409] sm:$0xff] %vm486, %v623
        %s627 = sand.u32 %s230, 1
        %s628 = scalar_lea.sflag [#allocation4], %s627
        %s629 = sand.u32 %s230, 1
        %s630 = smul.addr %s629, 8
        %s631 = scalar_lea.vmem [#allocation11], %s630
        // Predicated region
        $region77: #{tpu_custom_call.1} parent=55 // pred_check
          %p632 = pneg %p240
        $region78: #{tpu_custom_call.1} parent=55 // pred_check_branch
          %634 = sbr.rel (%p632) target = $region80
        $region79: #{tpu_custom_call.1} parent=55 // pred_region
          %636 = vsyncadd %s628, 0
          %s637 = smul.addr %s28, 8
          %s638 = scalar_lea.hbm %s9, %s637
          %s640 = sshll.u32 %s631, 4
          %s641 = int_to_ptr.vmem [resolvable:$true] %s640
          %s642 = sshll.u32 %s638, 4
          %s643 = int_to_ptr.hbm [resolvable:$true] %s642
          %645 = dma.vmem_to_hbm [thread:$0]  %s641, 128, %s643, %s628
        $region80: #{tpu_custom_call.1} parent=55 // pred_fallthru
          _
      $region56: #{tpu_custom_call.1} parent=5 // pred_fallthru
        _
      %p646 = scmp.le.s32.totalorder 2, %s23
      // Predicated region
      $region81: #{tpu_custom_call.1} parent=5 // pred_check
        %p647 = pneg %p646
      $region82: #{tpu_custom_call.1} parent=5 // pred_check_branch
        %649 = sbr.rel (%p647) target = $region84
      $region83: #{tpu_custom_call.1} parent=5 // pred_region
        %s650 = ssub.s32 %s23, 2
        // Predicated region
        $region85: #{tpu_custom_call.1} parent=83 // pred_check
          %p651 = pneg %p246
        $region86: #{tpu_custom_call.1} parent=83 // pred_check_branch
          %653 = sbr.rel (%p651) target = $region88
        $region87: #{tpu_custom_call.1} parent=83 // pred_region
          %s654 = sand.u32 %s231, 1
          %s655 = scalar_lea.sflag [#allocation4], %s654
          %s656 = sand.u32 %s231, 1
          %s657 = smul.addr %s656, 8
          %s658 = scalar_lea.vmem [#allocation11], %s657
          %660 = dma.done %s655, 128
        $region88: #{tpu_custom_call.1} parent=83 // pred_fallthru
          _
      $region84: #{tpu_custom_call.1} parent=5 // pred_fallthru
        _
    $region6: #{tpu_custom_call.1} parent=1 // loop_footer
      %s27 = sadd.s32 1, %s23
    $region7: #{tpu_custom_call.1} parent=1 // loop_footer_branch
      %22 = sbr.rel target = $region3
    $region8: #{tpu_custom_call.1} parent=1 // loop_exit
      _
    %661 = vsyncpa [#allocation3], 1
    %s662 = scalar_lea.sflag [#allocation3], 1
    %663 = vsyncpa %s662, 1
    %664 = vsyncpa [#allocation6], 1
    %665 = vsyncpa [#allocation9], 1
    %666 = vsyncpa [#allocation4], 1
    %s667 = scalar_lea.sflag [#allocation4], 1
    %668 = vsyncpa %s667, 1

// kernel: tpu_custom_call.1
$region0: #{tpu_custom_call.1}
  #allocation0 [shape = 'u32[]', space=smem, size = 0x4, offset = 0x4, fixed_abs, tag = 'smem constant byte address 0x4 - core index']
  #allocation1 [shape = 'u32[72,128]{1,0:T(1,128)}', space=vmem, size = 0x9000, scoped, tag = 'internal scratch']
  %s0 = inlined_call_operand.hbm [shape: bf16[2,8,32], index: 0, kind: input, shape index: {}]
  %s1 = inlined_call_operand.vmem [shape: bf16[32,96], index: 1, kind: input, shape index: {}]
  %s2 = inlined_call_operand.hbm [shape: f32[1,96], index: 2, kind: input, shape index: {}]
  %s3 = inlined_call_operand.hbm [shape: bf16[32,32], index: 3, kind: input, shape index: {}]
  %s4 = inlined_call_operand.hbm [shape: f32[1,32], index: 4, kind: input, shape index: {}]
  %s5 = inlined_call_operand.vmem [shape: bf16[16,8], index: 5, kind: input, shape index: {}]
  %s6 = inlined_call_operand.vmem [shape: bf16[8,8], index: 6, kind: input, shape index: {}]
  %s7 = inlined_call_operand.hbm [shape: bf16[8,8], index: 7, kind: input, shape index: {}]
  %s8 = inlined_call_operand.vmem [shape: f32[8,1], index: 8, kind: input, shape index: {}]
  %s9 = inlined_call_operand.hbm [shape: f32[2,8,32], index: 9, kind: output, shape index: {}]
  %s10 = sld [smem:[#allocation0]]
  $region89: #{tpu_custom_call.1} parent=0
    _
  %s12 = ssub.s32 1, %s10
  %s13 = scalar_select 0, %s12, %s10
  $region1: #{tpu_custom_call.1} parent=0
    #allocation2 [shape = 'u8[4096]{0}', space=vmem, size = 0x1000, scoped, tag = 'input window, operand 0']
    #allocation3 [shape = 's32[2]{0}', space=sflag, size = 0x8, scoped, tag = 'scoped memory for tpu_custom_call.1']
    #allocation4 [shape = 's32[2]{0}', space=sflag, size = 0x8, scoped, tag = 'scoped memory for tpu_custom_call.1']
    #allocation5 [shape = 'u8[512]{0}', space=vmem, size = 0x400, scoped, tag = 'input window, operand 2, single buffered']
    #allocation6 [shape = 's32[1]{0}', space=sflag, size = 0x4, scoped, tag = 'scoped memory for tpu_custom_call.1']
    #allocation7 [shape = 'u8[8192]{0}', space=vmem, size = 0x2000, scoped, tag = 'input window, operand 3, single buffered']
    #allocation8 [shape = 'u8[512]{0}', space=vmem, size = 0x400, scoped, tag = 'input window, operand 4, single buffered']
    #allocation9 [shape = 's32[1]{0}', space=sflag, size = 0x4, scoped, tag = 'scoped memory for tpu_custom_call.1']
    #allocation10 [shape = 'u8[2048]{0}', space=vmem, size = 0x800, scoped, tag = 'input window, operand 7, single buffered']
    #allocation11 [shape = 'u8[8192]{0}', space=vmem, size = 0x2000, scoped, tag = 'output window, operand 0']
    %14 = vsyncpa [#allocation3], 0
    %s15 = scalar_lea.sflag [#allocation3], 1
    %16 = vsyncpa %s15, 0
    %17 = vsyncpa [#allocation6], 0
    %18 = vsyncpa [#allocation9], 0
    %19 = vsyncpa [#allocation4], 0
    %s20 = scalar_lea.sflag [#allocation4], 1
    %21 = vsyncpa %s20, 0
    loop: start=0, step=1, limit=4
    $region2: #{tpu_custom_call.1} parent=1 // loop_pre_header
      _
    $region3: #{tpu_custom_call.1} parent=1 // loop_header
      %s23 = sphi 0, %s27
      %p24 = scmp.ge.s32.totalorder %s23, 4
      %s33 = sphi 0, %s35
      %s36 = sphi 0, %s33
      %s37 = sphi 0, %s36
      %s53 = sphi 0, %s37
      %s57 = sphi 0, %s57
      %s59 = sphi 0, %s57
      %s60 = sphi 0, %s59
      %s74 = sphi 0, %s60
      %s78 = sphi 0, %s78
      %s80 = sphi 0, %s78
      %s81 = sphi 0, %s80
      %s95 = sphi 0, %s81
      %s99 = sphi 0, %s99
      %s101 = sphi 0, %s99
      %s102 = sphi 0, %s101
      %s116 = sphi 0, %s102
      %s120 = sphi 0, %s120
      %s122 = sphi 0, %s120
      %s123 = sphi 0, %s122
      %s137 = sphi 0, %s123
      %s141 = sphi 0, %s141
      %s143 = sphi 0, %s141
      %s144 = sphi 0, %s143
      %s158 = sphi 0, %s144
      %s162 = sphi 0, %s162
      %s164 = sphi 0, %s162
      %s165 = sphi 0, %s164
      %s179 = sphi 0, %s165
      %s183 = sphi 0, %s183
      %s185 = sphi 0, %s183
      %s186 = sphi 0, %s185
      %s200 = sphi 0, %s186
      %s204 = sphi 0, %s204
      %s206 = sphi 0, %s204
      %s207 = sphi 0, %s206
      %s221 = sphi 0, %s207
      %s227 = sphi 0, %s229
      %s230 = sphi 0, %s227
      %s231 = sphi 0, %s230
      %s247 = sphi 0, %s231
    $region4: #{tpu_custom_call.1} parent=1 // loop_header_branch
      %26 = sbr.rel (%p24) target = $region8
    $region5: #{tpu_custom_call.1} parent=1 // loop_body
      %s28 = ssub.s32 %s23, 1
      %s29 = ssub.s32 %s23, 2
      %s30 = sadd.s32 %s23, 1
      %s31 = ssub.s32 %s23, %s30
      %p32 = scmp.eq.s32.totalorder %s31, 0
      %s34 = sadd.s32 %s33, 1
      %s35 = scalar_select %p32, %s33, %s34
      %p38 = pneg %p32
      %p39 = scmp.eq.s32.totalorder %s23, 1
      %p40 = por %p38, %p39
      %p41 = scmp.ne.s32.totalorder %s33, %s36
      %p42 = scmp.eq.s32.totalorder %s23, 0
      %p43 = por %p41, %p42
      %p44 = scmp.ne.s32.totalorder %s33, %s36
      %p45 = scmp.eq.s32.totalorder %s28, 1
      %p46 = por %p44, %p45
      %p47 = scmp.ne.s32.totalorder %s36, %s37
      %p48 = scmp.eq.s32.totalorder %s28, 0
      %p49 = por %p47, %p48
      %p50 = scmp.ne.s32.totalorder %s36, %s37
      %p51 = scmp.eq.s32.totalorder %s29, 1
      %p52 = por %p50, %p51
      %p54 = scmp.ne.s32.totalorder %s37, %s53
      %p55 = scmp.eq.s32.totalorder %s29, 0
      %p56 = por %p54, %p55
      %s58 = sadd.s32 %s57, 1
      %p61 = scmp.eq.s32.totalorder %s23, 1
      %p62 = scmp.ne.s32.totalorder %s57, %s59
      %p63 = scmp.eq.s32.totalorder %s23, 0
      %p64 = por %p62, %p63
      %p65 = scmp.ne.s32.totalorder %s57, %s59
      %p66 = scmp.eq.s32.totalorder %s28, 1
      %p67 = por %p65, %p66
      %p68 = scmp.ne.s32.totalorder %s59, %s60
      %p69 = scmp.eq.s32.totalorder %s28, 0
      %p70 = por %p68, %p69
      %p71 = scmp.ne.s32.totalorder %s59, %s60
      %p72 = scmp.eq.s32.totalorder %s29, 1
      %p73 = por %p71, %p72
      %p75 = scmp.ne.s32.totalorder %s60, %s74
      %p76 = scmp.eq.s32.totalorder %s29, 0
      %p77 = por %p75, %p76
      %s79 = sadd.s32 %s78, 1
      %p82 = scmp.eq.s32.totalorder %s23, 1
      %p83 = scmp.ne.s32.totalorder %s78, %s80
      %p84 = scmp.eq.s32.totalorder %s23, 0
      %p85 = por %p83, %p84
      %p86 = scmp.ne.s32.totalorder %s78, %s80
      %p87 = scmp.eq.s32.totalorder %s28, 1
      %p88 = por %p86, %p87
      %p89 = scmp.ne.s32.totalorder %s80, %s81
      %p90 = scmp.eq.s32.totalorder %s28, 0
      %p91 = por %p89, %p90
      %p92 = scmp.ne.s32.totalorder %s80, %s81
      %p93 = scmp.eq.s32.totalorder %s29, 1
      %p94 = por %p92, %p93
      %p96 = scmp.ne.s32.totalorder %s81, %s95
      %p97 = scmp.eq.s32.totalorder %s29, 0
      %p98 = por %p96, %p97
      %s100 = sadd.s32 %s99, 1
      %p103 = scmp.eq.s32.totalorder %s23, 1
      %p104 = scmp.ne.s32.totalorder %s99, %s101
      %p105 = scmp.eq.s32.totalorder %s23, 0
      %p106 = por %p104, %p105
      %p107 = scmp.ne.s32.totalorder %s99, %s101
      %p108 = scmp.eq.s32.totalorder %s28, 1
      %p109 = por %p107, %p108
      %p110 = scmp.ne.s32.totalorder %s101, %s102
      %p111 = scmp.eq.s32.totalorder %s28, 0
      %p112 = por %p110, %p111
      %p113 = scmp.ne.s32.totalorder %s101, %s102
      %p114 = scmp.eq.s32.totalorder %s29, 1
      %p115 = por %p113, %p114
      %p117 = scmp.ne.s32.totalorder %s102, %s116
      %p118 = scmp.eq.s32.totalorder %s29, 0
      %p119 = por %p117, %p118
      %s121 = sadd.s32 %s120, 1
      %p124 = scmp.eq.s32.totalorder %s23, 1
      %p125 = scmp.ne.s32.totalorder %s120, %s122
      %p126 = scmp.eq.s32.totalorder %s23, 0
      %p127 = por %p125, %p126
      %p128 = scmp.ne.s32.totalorder %s120, %s122
      %p129 = scmp.eq.s32.totalorder %s28, 1
      %p130 = por %p128, %p129
      %p131 = scmp.ne.s32.totalorder %s122, %s123
      %p132 = scmp.eq.s32.totalorder %s28, 0
      %p133 = por %p131, %p132
      %p134 = scmp.ne.s32.totalorder %s122, %s123
      %p135 = scmp.eq.s32.totalorder %s29, 1
      %p136 = por %p134, %p135
      %p138 = scmp.ne.s32.totalorder %s123, %s137
      %p139 = scmp.eq.s32.totalorder %s29, 0
      %p140 = por %p138, %p139
      %s142 = sadd.s32 %s141, 1
      %p145 = scmp.eq.s32.totalorder %s23, 1
      %p146 = scmp.ne.s32.totalorder %s141, %s143
      %p147 = scmp.eq.s32.totalorder %s23, 0
      %p148 = por %p146, %p147
      %p149 = scmp.ne.s32.totalorder %s141, %s143
      %p150 = scmp.eq.s32.totalorder %s28, 1
      %p151 = por %p149, %p150
      %p152 = scmp.ne.s32.totalorder %s143, %s144
      %p153 = scmp.eq.s32.totalorder %s28, 0
      %p154 = por %p152, %p153
      %p155 = scmp.ne.s32.totalorder %s143, %s144
      %p156 = scmp.eq.s32.totalorder %s29, 1
      %p157 = por %p155, %p156
      %p159 = scmp.ne.s32.totalorder %s144, %s158
      %p160 = scmp.eq.s32.totalorder %s29, 0
      %p161 = por %p159, %p160
      %s163 = sadd.s32 %s162, 1
      %p166 = scmp.eq.s32.totalorder %s23, 1
      %p167 = scmp.ne.s32.totalorder %s162, %s164
      %p168 = scmp.eq.s32.totalorder %s23, 0
      %p169 = por %p167, %p168
      %p170 = scmp.ne.s32.totalorder %s162, %s164
      %p171 = scmp.eq.s32.totalorder %s28, 1
      %p172 = por %p170, %p171
      %p173 = scmp.ne.s32.totalorder %s164, %s165
      %p174 = scmp.eq.s32.totalorder %s28, 0
      %p175 = por %p173, %p174
      %p176 = scmp.ne.s32.totalorder %s164, %s165
      %p177 = scmp.eq.s32.totalorder %s29, 1
      %p178 = por %p176, %p177
      %p180 = scmp.ne.s32.totalorder %s165, %s179
      %p181 = scmp.eq.s32.totalorder %s29, 0
      %p182 = por %p180, %p181
      %s184 = sadd.s32 %s183, 1
      %p187 = scmp.eq.s32.totalorder %s23, 1
      %p188 = scmp.ne.s32.totalorder %s183, %s185
      %p189 = scmp.eq.s32.totalorder %s23, 0
      %p190 = por %p188, %p189
      %p191 = scmp.ne.s32.totalorder %s183, %s185
      %p192 = scmp.eq.s32.totalorder %s28, 1
      %p193 = por %p191, %p192
      %p194 = scmp.ne.s32.totalorder %s185, %s186
      %p195 = scmp.eq.s32.totalorder %s28, 0
      %p196 = por %p194, %p195
      %p197 = scmp.ne.s32.totalorder %s185, %s186
      %p198 = scmp.eq.s32.totalorder %s29, 1
      %p199 = por %p197, %p198
      %p201 = scmp.ne.s32.totalorder %s186, %s200
      %p202 = scmp.eq.s32.totalorder %s29, 0
      %p203 = por %p201, %p202
      %s205 = sadd.s32 %s204, 1
      %p208 = scmp.eq.s32.totalorder %s23, 1
      %p209 = scmp.ne.s32.totalorder %s204, %s206
      %p210 = scmp.eq.s32.totalorder %s23, 0
      %p211 = por %p209, %p210
      %p212 = scmp.ne.s32.totalorder %s204, %s206
      %p213 = scmp.eq.s32.totalorder %s28, 1
      %p214 = por %p212, %p213
      %p215 = scmp.ne.s32.totalorder %s206, %s207
      %p216 = scmp.eq.s32.totalorder %s28, 0
      %p217 = por %p215, %p216
      %p218 = scmp.ne.s32.totalorder %s206, %s207
      %p219 = scmp.eq.s32.totalorder %s29, 1
      %p220 = por %p218, %p219
      %p222 = scmp.ne.s32.totalorder %s207, %s221
      %p223 = scmp.eq.s32.totalorder %s29, 0
      %p224 = por %p222, %p223
      %s225 = ssub.s32 %s23, %s30
      %p226 = scmp.eq.s32.totalorder %s225, 0
      %s228 = sadd.s32 %s227, 1
      %s229 = scalar_select %p226, %s227, %s228
      %p232 = pneg %p226
      %p233 = scmp.eq.s32.totalorder %s23, 1
      %p234 = por %p232, %p233
      %p235 = scmp.ne.s32.totalorder %s227, %s230
      %p236 = scmp.eq.s32.totalorder %s23, 0
      %p237 = por %p235, %p236
      %p238 = scmp.ne.s32.totalorder %s227, %s230
      %p239 = scmp.eq.s32.totalorder %s28, 1
      %p240 = por %p238, %p239
      %p241 = scmp.ne.s32.totalorder %s230, %s231
      %p242 = scmp.eq.s32.totalorder %s28, 0
      %p243 = por %p241, %p242
      %p244 = scmp.ne.s32.totalorder %s230, %s231
      %p245 = scmp.eq.s32.totalorder %s29, 1
      %p246 = por %p244, %p245
      %p248 = scmp.ne.s32.totalorder %s231, %s247
      %p249 = scmp.eq.s32.totalorder %s29, 0
      %p250 = por %p248, %p249
      %p251 = scmp.le.s32.totalorder 1, %s23
      %p252 = scmp.lt.s32.totalorder %s23, 3
      %p253 = pnand %p251, %p252
      %p254 = pneg %p253
      // Predicated region
      $region9: #{tpu_custom_call.1} parent=5 // pred_check
        _
      $region10: #{tpu_custom_call.1} parent=5 // pred_check_branch
        %256 = sbr.rel (%p253) target = $region12
      $region11: #{tpu_custom_call.1} parent=5 // pred_region
        %s257 = ssub.s32 %s23, 1
        // Predicated region
        $region13: #{tpu_custom_call.1} parent=11 // pred_check
          %p258 = pneg %p70
        $region14: #{tpu_custom_call.1} parent=11 // pred_check_branch
          %260 = sbr.rel (%p258) target = $region16
        $region15: #{tpu_custom_call.1} parent=11 // pred_region
          _
        $region16: #{tpu_custom_call.1} parent=11 // pred_fallthru
          _
        // Predicated region
        $region17: #{tpu_custom_call.1} parent=11 // pred_check
          %p261 = pneg %p91
        $region18: #{tpu_custom_call.1} parent=11 // pred_check_branch
          %263 = sbr.rel (%p261) target = $region20
        $region19: #{tpu_custom_call.1} parent=11 // pred_region
          %265 = vsyncadd [#allocation6], 0
          %s267 = sshll.u32 %s2, 4
          %s268 = int_to_ptr.hbm [resolvable:$true] %s267
          %s269 = sshll.u32 [#allocation5], 4
          %s270 = int_to_ptr.vmem [resolvable:$true] %s269
          %272 = dma.hbm_to_vmem [thread:$0]  %s268, 16, %s270, [#allocation6]
        $region20: #{tpu_custom_call.1} parent=11 // pred_fallthru
          _
        // Predicated region
        $region21: #{tpu_custom_call.1} parent=11 // pred_check
          %p273 = pneg %p112
        $region22: #{tpu_custom_call.1} parent=11 // pred_check_branch
          %275 = sbr.rel (%p273) target = $region24
        $region23: #{tpu_custom_call.1} parent=11 // pred_region
          %277 = vsyncadd [#allocation6], 0
          %s278 = sshll.u32 %s3, 4
          %s279 = int_to_ptr.hbm [resolvable:$true] %s278
          %s280 = sshll.u32 [#allocation7], 4
          %s281 = int_to_ptr.vmem [resolvable:$true] %s280
          %286 = dma.hbm_to_vmem [thread:$0]  %s279, 256, %s281, [#allocation6], 64, 64, 4
        $region24: #{tpu_custom_call.1} parent=11 // pred_fallthru
          _
        // Predicated region
        $region25: #{tpu_custom_call.1} parent=11 // pred_check
          %p287 = pneg %p133
        $region26: #{tpu_custom_call.1} parent=11 // pred_check_branch
          %289 = sbr.rel (%p287) target = $region28
        $region27: #{tpu_custom_call.1} parent=11 // pred_region
          %291 = vsyncadd [#allocation9], 0
          %s293 = sshll.u32 %s4, 4
          %s294 = int_to_ptr.hbm [resolvable:$true] %s293
          %s295 = sshll.u32 [#allocation8], 4
          %s296 = int_to_ptr.vmem [resolvable:$true] %s295
          %298 = dma.hbm_to_vmem [thread:$0]  %s294, 16, %s296, [#allocation9]
        $region28: #{tpu_custom_call.1} parent=11 // pred_fallthru
          _
        // Predicated region
        $region29: #{tpu_custom_call.1} parent=11 // pred_check
          %p299 = pneg %p154
        $region30: #{tpu_custom_call.1} parent=11 // pred_check_branch
          %301 = sbr.rel (%p299) target = $region32
        $region31: #{tpu_custom_call.1} parent=11 // pred_region
          _
        $region32: #{tpu_custom_call.1} parent=11 // pred_fallthru
          _
        // Predicated region
        $region33: #{tpu_custom_call.1} parent=11 // pred_check
          %p302 = pneg %p175
        $region34: #{tpu_custom_call.1} parent=11 // pred_check_branch
          %304 = sbr.rel (%p302) target = $region36
        $region35: #{tpu_custom_call.1} parent=11 // pred_region
          _
        $region36: #{tpu_custom_call.1} parent=11 // pred_fallthru
          _
        // Predicated region
        $region37: #{tpu_custom_call.1} parent=11 // pred_check
          %p305 = pneg %p196
        $region38: #{tpu_custom_call.1} parent=11 // pred_check_branch
          %307 = sbr.rel (%p305) target = $region40
        $region39: #{tpu_custom_call.1} parent=11 // pred_region
          %309 = vsyncadd [#allocation9], 0
          %s311 = sshll.u32 %s7, 4
          %s312 = int_to_ptr.hbm [resolvable:$true] %s311
          %s313 = sshll.u32 [#allocation10], 4
          %s314 = int_to_ptr.vmem [resolvable:$true] %s313
          %316 = dma.hbm_to_vmem [thread:$0]  %s312, 64, %s314, [#allocation9]
        $region40: #{tpu_custom_call.1} parent=11 // pred_fallthru
          _
        // Predicated region
        $region41: #{tpu_custom_call.1} parent=11 // pred_check
          %p317 = pneg %p217
        $region42: #{tpu_custom_call.1} parent=11 // pred_check_branch
          %319 = sbr.rel (%p317) target = $region44
        $region43: #{tpu_custom_call.1} parent=11 // pred_region
          _
        $region44: #{tpu_custom_call.1} parent=11 // pred_fallthru
          _
      $region12: #{tpu_custom_call.1} parent=5 // pred_fallthru
        _
      %p320 = scmp.lt.s32.totalorder %s23, 2
      // Predicated region
      $region45: #{tpu_custom_call.1} parent=5 // pred_check
        %p321 = pneg %p320
      $region46: #{tpu_custom_call.1} parent=5 // pred_check_branch
        %323 = sbr.rel (%p321) target = $region48
      $region47: #{tpu_custom_call.1} parent=5 // pred_region
        // Predicated region
        $region49: #{tpu_custom_call.1} parent=47 // pred_check
          %p324 = pneg %p43
        $region50: #{tpu_custom_call.1} parent=47 // pred_check_branch
          %326 = sbr.rel (%p324) target = $region52
        $region51: #{tpu_custom_call.1} parent=47 // pred_region
          %s327 = sand.u32 %s33, 1
          %s328 = scalar_lea.sflag [#allocation3], %s327
          %s329 = sand.u32 %s33, 1
          %s330 = smul.addr %s329, 4
          %s331 = scalar_lea.vmem [#allocation2], %s330
          %333 = vsyncadd %s328, 0
          %s334 = smul.addr %s23, 4
          %s335 = scalar_lea.hbm %s0, %s334
          %s337 = sshll.u32 %s335, 4
          %s338 = int_to_ptr.hbm [resolvable:$true] %s337
          %s339 = sshll.u32 %s331, 4
          %s340 = int_to_ptr.vmem [resolvable:$true] %s339
          %342 = dma.hbm_to_vmem [thread:$0]  %s338, 64, %s340, %s328
        $region52: #{tpu_custom_call.1} parent=47 // pred_fallthru
          _
      $region48: #{tpu_custom_call.1} parent=5 // pred_fallthru
        _
      %p343 = scmp.le.s32.totalorder 1, %s23
      %p344 = scmp.lt.s32.totalorder %s23, 3
      %p345 = pnand %p343, %p344
      %p346 = pneg %p345
      // Predicated region
      $region53: #{tpu_custom_call.1} parent=5 // pred_check
        _
      $region54: #{tpu_custom_call.1} parent=5 // pred_check_branch
        %348 = sbr.rel (%p345) target = $region56
      $region55: #{tpu_custom_call.1} parent=5 // pred_region
        %s349 = ssub.s32 %s23, 1
        %s350 = sand.u32 %s36, 1
        %s351 = scalar_lea.sflag [#allocation3], %s350
        %s352 = sand.u32 %s36, 1
        %s353 = smul.addr %s352, 4
        %s354 = scalar_lea.vmem [#allocation2], %s353
        // Predicated region
        $region57: #{tpu_custom_call.1} parent=55 // pred_check
          %p355 = pneg %p49
        $region58: #{tpu_custom_call.1} parent=55 // pred_check_branch
          %357 = sbr.rel (%p355) target = $region60
        $region59: #{tpu_custom_call.1} parent=55 // pred_region
          %359 = dma.done %s351, 64
        $region60: #{tpu_custom_call.1} parent=55 // pred_fallthru
          _
        // Predicated region
        $region61: #{tpu_custom_call.1} parent=55 // pred_check
          %p360 = pneg %p91
        $region62: #{tpu_custom_call.1} parent=55 // pred_check_branch
          %362 = sbr.rel (%p360) target = $region64
        $region63: #{tpu_custom_call.1} parent=55 // pred_region
          %364 = dma.done [#allocation6], 16
        $region64: #{tpu_custom_call.1} parent=55 // pred_fallthru
          _
        // Predicated region
        $region65: #{tpu_custom_call.1} parent=55 // pred_check
          %p365 = pneg %p112
        $region66: #{tpu_custom_call.1} parent=55 // pred_check_branch
          %367 = sbr.rel (%p365) target = $region68
        $region67: #{tpu_custom_call.1} parent=55 // pred_region
          %369 = dma.done [#allocation6], 256
        $region68: #{tpu_custom_call.1} parent=55 // pred_fallthru
          _
        // Predicated region
        $region69: #{tpu_custom_call.1} parent=55 // pred_check
          %p370 = pneg %p133
        $region70: #{tpu_custom_call.1} parent=55 // pred_check_branch
          %372 = sbr.rel (%p370) target = $region72
        $region71: #{tpu_custom_call.1} parent=55 // pred_region
          %374 = dma.done [#allocation9], 16
        $region72: #{tpu_custom_call.1} parent=55 // pred_fallthru
          _
        // Predicated region
        $region73: #{tpu_custom_call.1} parent=55 // pred_check
          %p375 = pneg %p196
        $region74: #{tpu_custom_call.1} parent=55 // pred_check_branch
          %377 = sbr.rel (%p375) target = $region76
        $region75: #{tpu_custom_call.1} parent=55 // pred_region
          %379 = dma.done [#allocation9], 64
        $region76: #{tpu_custom_call.1} parent=55 // pred_fallthru
          _
        %s380 = sand.u32 %s36, 1
        %s381 = scalar_lea.sflag [#allocation3], %s380
        %s382 = sand.u32 %s36, 1
        %s383 = smul.addr %s382, 4
        %s384 = scalar_lea.vmem [#allocation2], %s383
        %p385 = pneg %p49
        %p386 = pneg %p46
        %p387 = pneg %p70
        %p388 = pneg %p67
        %p389 = pneg %p91
        %p390 = pneg %p88
        %p391 = pneg %p112
        %p392 = pneg %p109
        %p393 = pneg %p133
        %p394 = pneg %p130
        %p395 = pneg %p154
        %p396 = pneg %p151
        %p397 = pneg %p175
        %p398 = pneg %p172
        %p399 = pneg %p196
        %p400 = pneg %p193
        %p401 = pneg %p217
        %p402 = pneg %p214
        %p403 = pneg %p243
        %p404 = pneg %p240
        %s405 = sand.u32 %s230, 1
        %s406 = scalar_lea.sflag [#allocation4], %s405
        %s407 = sand.u32 %s230, 1
        %s408 = smul.addr %s407, 8
        %s409 = scalar_lea.vmem [#allocation11], %s408
        %v411 = vld [vmem:[%s1] sm:$0xf]
        %v412 = vld [vmem:[%s1 + $0x4] sm:$0xf]
        %v413 = vld [vmem:[%s1 + $0x8] sm:$0xf]
        %v414 = vld [vmem:[%s1 + $0xc] sm:$0xf]
        %v415 = vld [vmem:[#allocation7] sm:$0xf]
        %v416 = vld [vmem:[#allocation7 + $0x4] sm:$0xf]
        %v417 = vld [vmem:[#allocation7 + $0x8] sm:$0xf]
        %v418 = vld [vmem:[#allocation7 + $0xc] sm:$0xf]
        %v419 = vld [vmem:[#allocation8] sm:$0x1]
        %v420 = vld [vmem:[%s5] sm:$0xf]
        %v421 = vld [vmem:[%s5 + $0x4] sm:$0xf]
        %v422 = vld [vmem:[%s6] sm:$0xf]
        %v423 = vld [vmem:[#allocation10] sm:$0xf]
        %v424 = vld [vmem:[%s8] sm:$0xff]
        %426 = vset.pattern.permute.xlu0 0
        %427 = vperm.xlu0 %426, %v424
        %v428 = vpop.permute.xlu0 %427
        %v430 = vlaneseq
        %v431 = vshrl.u32 %v430, 7
        %v432 = vadd.s32 %v431, 8
        %vm433 = vcmp.eq.s32.totalorder %v431, 0
        %vm434 = vcmp.eq.s32.totalorder %v432, 0
        %v435 = vld [vmem:[#allocation5] sm:$0x1]
        %v436 = vsel %vm433, 1, 0
        %v437 = vsel %vm434, 1, 0
        %vm438 = vcmp.eq.s32.totalorder %v436, 1
        %vm439 = vcmp.eq.s32.totalorder %v437, 1
        %v441 = vperm.slane %v435, 0
        %v443 = vsel %vm438, %v441, 0.0
        %v444 = vsel %vm439, %v441, 0.0
        %v445 = vld [vmem:[%s354] sm:$0xf]
        %v448 = vunpack.c.l.b16 %v420
        %v449 = vunpack.c.l.b16 %v421
        %v450 = vpack.c.b16 %v449, %v448
        %vm451 = vcmask 64512
        %v453 = vsel %vm451, %v450, 0
        %vm455 = vcmask 1043456
        %v457 = vsel %vm455, %v445, 0
        %459 = vmatpush.bf16.msra.mxu0 0
        %460 = vmatpush.bf16.msra.mxu0 0
        %461 = vmatpush.bf16.msra.mxu0 0
        %462 = vmatpush.bf16.msra.mxu0 0
        %463 = vmatpush.bf16.msra.mxu0 0
        %464 = vmatpush.bf16.msra.mxu0 0
        %465 = vmatpush.bf16.msra.mxu0 0
        %466 = vmatpush.bf16.msra.mxu0 %v457
        %467 = vmatmul.bf16.gmra.mxu0 %v453
        %v468 = vpop.f32.mrf.mxu0
        %v469 = vadd.f32 0.0, %v468
        %v470 = vpop.f32.mrf.mxu0
        %v471 = vadd.f32 0.0, %v470
        %472 = vdwg.mxu0
        %v473 = vpack.c.bf16 %v471, %v469
        %v478 = vunpack.c.l.b16 %v411
        %v479 = vunpack.c.l.b16 %v412
        %v480 = vunpack.c.l.b16 %v413
        %v481 = vunpack.c.l.b16 %v414
        %v482 = vpack.c.b16 %v479, %v478
        %v483 = vpack.c.b16 %v481, %v480
        %vm486 = vcmask 261120
        %v488 = vsel %vm486, %v473, 0
        %490 = vmatpush.bf16.msra.mxu0 0
        %491 = vmatpush.bf16.msra.mxu0 0
        %492 = vmatpush.bf16.msra.mxu0 0
        %493 = vmatpush.bf16.msra.mxu0 0
        %494 = vmatpush.bf16.msra.mxu0 0
        %495 = vmatpush.bf16.msra.mxu0 0
        %496 = vmatpush.bf16.msra.mxu0 %v483
        %497 = vmatpush.bf16.msra.mxu0 %v482
        %498 = vmatmul.bf16.gmra.mxu0 %v488
        %v499 = vpop.f32.mrf.mxu0
        %v500 = vadd.f32 %v443, %v499
        %v501 = vpop.f32.mrf.mxu0
        %v502 = vadd.f32 %v444, %v501
        %503 = vdwg.mxu0
        %v504 = vmul.f32 %v500, %v500
        %v505 = vmul.f32 %v502, %v502
        %v506 = vadd.f32 %v504, %v505
        %508 = vrot.lane.b32.xlu0 %v506, 96
        %v509 = vpop.permute.xlu0 %508
        %v511 = vmul.f32 %v506, %v509
        %v512 = vrsqrt.pop %v511
        %v513 = vmul.f32 %v512, %v511
        %v514 = vmul.f32 %v513, %v512
        %v515 = vmul.f32 0.5, %v514
        %v516 = vsub.f32 1.5, %v515
        %v517 = vmul.f32 %v512, %v516
        %v518 = vmul.f32 %v511, %v517
        %vm519 = vcmp.eq.f32.partialorder %v511, inf
        %v520 = vsel %vm519, %v511, %v518
        %vm521 = vcmp.eq.f32.partialorder %v511, 0.0
        %v522 = vand.u32 %v511, 2147483648
        %v523 = vsel %vm521, %v522, %v520
        %v524 = vsel %vm486, %v523, -inf
        %v525 = vrot.slane %v524, 4
        %v526 = vmax.f32 %v524, %v525
        %v527 = vrot.slane %v526, 2
        %v528 = vmax.f32 %v526, %v527
        %v529 = vrot.slane %v528, 1
        %v530 = vmax.f32 %v528, %v529
        %v531 = vsub.f32 %v523, %v530
        %v532 = vmul.f32 %v531, 1.442695
        %v533 = vpow.pop %v532
        %v534 = vmul.f32 %v533, %v428
        %v535 = vsel %vm486, %v534, 0.0
        %v536 = vrot.slane %v535, 4
        %v537 = vadd.f32 %v535, %v536
        %v538 = vrot.slane %v537, 2
        %v539 = vadd.f32 %v537, %v538
        %v540 = vrot.slane %v539, 1
        %v541 = vadd.f32 %v539, %v540
        %v542 = vrcp.pop %v541
        %v543 = vmul.f32 %v533, %v542
        %545 = vrot.lane.b32.xlu0 %v500, 64
        %v546 = vpop.permute.xlu0 %545
        %v548 = vmul.f32 %v543, %v546
        %v549 = vpack.c.bf16 %v548, %v548
        %551 = vrot.lane.b32.xlu0 %v502, 64
        %v552 = vpop.permute.xlu0 %551
        %v554 = vmul.f32 %v543, %v552
        %v555 = vpack.c.bf16 %v554, %v554
        %v557 = vsel %vm451, %v423, 0
        %v560 = vsel %vm455, %v555, 0
        %562 = vmatpush.bf16.msra.mxu0 0
        %563 = vmatpush.bf16.msra.mxu0 0
        %564 = vmatpush.bf16.msra.mxu0 0
        %565 = vmatpush.bf16.msra.mxu0 0
        %566 = vmatpush.bf16.msra.mxu0 0
        %567 = vmatpush.bf16.msra.mxu0 0
        %568 = vmatpush.bf16.msra.mxu0 0
        %569 = vmatpush.bf16.msra.mxu0 %v560
        %570 = vmatmul.bf16.gmra.mxu0 %v557
        %v571 = vpop.f32.mrf.mxu0
        %v572 = vadd.f32 0.0, %v571
        %v573 = vpop.f32.mrf.mxu0
        %574 = vdwg.mxu0
        %v576 = vsel %vm451, %v422, 0
        %v579 = vsel %vm455, %v549, 0
        %581 = vmatpush.bf16.msra.mxu0 0
        %582 = vmatpush.bf16.msra.mxu0 0
        %583 = vmatpush.bf16.msra.mxu0 0
        %584 = vmatpush.bf16.msra.mxu0 0
        %585 = vmatpush.bf16.msra.mxu0 0
        %586 = vmatpush.bf16.msra.mxu0 0
        %587 = vmatpush.bf16.msra.mxu0 0
        %588 = vmatpush.bf16.msra.mxu0 %v579
        %589 = vmatmul.bf16.gmra.mxu0 %v576
        %v590 = vpop.f32.mrf.mxu0
        %v591 = vadd.f32 %v572, %v590
        %v592 = vpop.f32.mrf.mxu0
        %593 = vdwg.mxu0
        %v594 = vpack.c.bf16 %v591, %v591
        %v596 = vperm.slane %v419, 0
        %v602 = vunpack.c.l.b16 %v415
        %v603 = vunpack.c.l.b16 %v416
        %v604 = vunpack.c.l.b16 %v417
        %v605 = vunpack.c.l.b16 %v418
        %v606 = vpack.c.b16 %v603, %v602
        %v607 = vpack.c.b16 %v605, %v604
        %v611 = vsel %vm486, %v594, 0
        %613 = vmatpush.bf16.msra.mxu0 0
        %614 = vmatpush.bf16.msra.mxu0 0
        %615 = vmatpush.bf16.msra.mxu0 0
        %616 = vmatpush.bf16.msra.mxu0 0
        %617 = vmatpush.bf16.msra.mxu0 0
        %618 = vmatpush.bf16.msra.mxu0 0
        %619 = vmatpush.bf16.msra.mxu0 %v607
        %620 = vmatpush.bf16.msra.mxu0 %v606
        %621 = vmatmul.bf16.gmra.mxu0 %v611
        %v622 = vpop.f32.mrf.mxu0
        %v623 = vadd.f32 %v596, %v622
        %v624 = vpop.f32.mrf.mxu0
        %625 = vdwg.mxu0
        %626 = vst.msk [vmem:[%s409] sm:$0xff] %vm486, %v623
        %s627 = sand.u32 %s230, 1
        %s628 = scalar_lea.sflag [#allocation4], %s627
        %s629 = sand.u32 %s230, 1
        %s630 = smul.addr %s629, 8
        %s631 = scalar_lea.vmem [#allocation11], %s630
        // Predicated region
        $region77: #{tpu_custom_call.1} parent=55 // pred_check
          %p632 = pneg %p240
        $region78: #{tpu_custom_call.1} parent=55 // pred_check_branch
          %634 = sbr.rel (%p632) target = $region80
        $region79: #{tpu_custom_call.1} parent=55 // pred_region
          %636 = vsyncadd %s628, 0
          %s637 = smul.addr %s28, 8
          %s638 = scalar_lea.hbm %s9, %s637
          %s640 = sshll.u32 %s631, 4
          %s641 = int_to_ptr.vmem [resolvable:$true] %s640
          %s642 = sshll.u32 %s638, 4
          %s643 = int_to_ptr.hbm [resolvable:$true] %s642
          %645 = dma.vmem_to_hbm [thread:$0]  %s641, 128, %s643, %s628
        $region80: #{tpu_custom_call.1} parent=55 // pred_fallthru
          _
      $region56: #{tpu_custom_call.1} parent=5 // pred_fallthru
        _
      %p646 = scmp.le.s32.totalorder 2, %s23
      // Predicated region
      $region81: #{tpu_custom_call.1} parent=5 // pred_check
        %p647 = pneg %p646
      $region82: #{tpu_custom_call.1} parent=5 // pred_check_branch
        %649 = sbr.rel (%p647) target = $region84
      $region83: #{tpu_custom_call.1} parent=5 // pred_region
        %s650 = ssub.s32 %s23, 2
        // Predicated region
        $region85: #{tpu_custom_call.1} parent=83 // pred_check
          %p651 = pneg %p246
        $region86: #{tpu_custom_call.1} parent=83 // pred_check_branch
          %653 = sbr.rel (%p651) target = $region88
        $region87: #{tpu_custom_call.1} parent=83 // pred_region
          %s654 = sand.u32 %s231, 1
          %s655 = scalar_lea.sflag [#allocation4], %s654
          %s656 = sand.u32 %s231, 1
          %s657 = smul.addr %s656, 8
          %s658 = scalar_lea.vmem [#allocation11], %s657
          %660 = dma.done %s655, 128
        $region88: #{tpu_custom_call.1} parent=83 // pred_fallthru
          _
      $region84: #{tpu_custom_call.1} parent=5 // pred_fallthru
        _
    $region6: #{tpu_custom_call.1} parent=1 // loop_footer
      %s27 = sadd.s32 1, %s23
    $region7: #{tpu_custom_call.1} parent=1 // loop_footer_branch
      %22 = sbr.rel target = $region3
    $region8: #{tpu_custom_call.1} parent=1 // loop_exit
      _
    %661 = vsyncpa [#allocation3], 1
    %s662 = scalar_lea.sflag [#allocation3], 1
    %663 = vsyncpa %s662, 1
    %664 = vsyncpa [#allocation6], 1
    %665 = vsyncpa [#allocation9], 1
    %666 = vsyncpa [#allocation4], 1
    %s667 = scalar_lea.sflag [#allocation4], 1
    %668 = vsyncpa %s667, 1

</llo_original>
